<compile_context>
chip_gen: v5e
topology: v5e:2x2
jax: 0.10.0
libtpu: 0.0.40
codegen_flags: <defaults>
</compile_context>

<pallas_src>
import functools

import jax
import jax.numpy as jnp
from jax.experimental import pallas as pl
from jax.experimental.pallas import tpu as pltpu


def photo_mlp_kernel(x_ref, w1_ref, b1_ref, w2_ref, b2_ref, w3_ref, b3_ref,
                     o_ref):
    x = x_ref[...]

    # fc1 + ReLU (f32 accumulation on the MXU regardless of I/O dtype).
    h1 = jnp.dot(x, w1_ref[...], preferred_element_type=jnp.float32)
    h1 = jnp.maximum(h1 + b1_ref[...], 0.0)

    # fc2 + ReLU (cast activations back to the weight dtype so the bf16 MXU
    # path is used when streaming bf16; no-op in the f32 configuration).
    h2 = jnp.dot(h1.astype(w2_ref.dtype), w2_ref[...],
                 preferred_element_type=jnp.float32)
    h2 = jnp.maximum(h2 + b2_ref[...], 0.0)

    # fc3 + 255 * sigmoid, cast only at the store.
    z = jnp.dot(h2.astype(w3_ref.dtype), w3_ref[...],
                preferred_element_type=jnp.float32)
    z = z + b3_ref[...]
    o_ref[...] = (255.0 * jax.nn.sigmoid(z)).astype(o_ref.dtype)


@functools.partial(jax.jit, static_argnames=("block_b", "io_dtype"))
def photo_mlp_forward(x, w1, b1, w2, b2, w3, b3, *, block_b=512,
                      io_dtype=jnp.float32):
    B, d_in = x.shape
    d_h1 = w1.shape[1]
    d_h2 = w2.shape[1]
    d_out = w3.shape[1]

    # Pick the batch tile:
    #   - never larger than the batch,
    #   - at least 2 grid steps when B >= 16 (v7x has 2 TensorCores; a single
    #     grid step would leave one idle),
    #   - multiple of 8 sublanes.
    bb = min(int(block_b), B)
    if B >= 16:
        bb = min(bb, (B + 1) // 2)
    bb = max(8, (bb // 8) * 8)

    grid = (pl.cdiv(B, bb),)

    io_dtype = jnp.dtype(io_dtype)
    x_io = x.astype(io_dtype)
    w1_io = w1.astype(io_dtype)
    w2_io = w2.astype(io_dtype)
    w3_io = w3.astype(io_dtype)

    itemsize = io_dtype.itemsize
    cost = pl.CostEstimate(
        flops=2 * B * (d_in * d_h1 + d_h1 * d_h2 + d_h2 * d_out),
        transcendentals=B * d_out,
        bytes_accessed=(B * (d_in + d_out) * itemsize
                        + (d_in * d_h1 + d_h1 * d_h2 + d_h2 * d_out) * itemsize
                        + (d_h1 + d_h2 + d_out) * 4),
    )

    return pl.pallas_call(
        photo_mlp_kernel,
        out_shape=jax.ShapeDtypeStruct((B, d_out), io_dtype),
        grid_spec=pltpu.PrefetchScalarGridSpec(
            num_scalar_prefetch=0,
            grid=grid,
            in_specs=[
                pl.BlockSpec((bb, d_in), lambda i: (i, 0)),     # x tile (streams)
                pl.BlockSpec((d_in, d_h1), lambda i: (0, 0)),   # W1 (resident)
                pl.BlockSpec((1, d_h1), lambda i: (0, 0)),      # b1
                pl.BlockSpec((d_h1, d_h2), lambda i: (0, 0)),   # W2
                pl.BlockSpec((1, d_h2), lambda i: (0, 0)),      # b2
                pl.BlockSpec((d_h2, d_out), lambda i: (0, 0)),  # W3
                pl.BlockSpec((1, d_out), lambda i: (0, 0)),     # b3
            ],
            # Full-width (bb, 320) output block: lane-dense, no N tiling/padding.
            out_specs=pl.BlockSpec((bb, d_out), lambda i: (i, 0)),
        ),
        compiler_params=pltpu.CompilerParams(
            dimension_semantics=("parallel",)),
        cost_estimate=cost,
    )(x_io, w1_io, b1, w2_io, b2, w3_io, b3)


def init_linear_params(key, fan_in, fan_out):
    """Deterministic init mimicking nn.Linear's uniform(-1/sqrt(fan_in), ...)."""
    kw, kb = jax.random.split(key)
    bound = 1.0 / jnp.sqrt(jnp.float32(fan_in))
    # Stored as (in, out), i.e. already transposed relative to PyTorch's (out, in).
    w = jax.random.uniform(kw, (fan_in, fan_out), jnp.float32, -bound, bound)
    b = jax.random.uniform(kb, (1, fan_out), jnp.float32, -bound, bound)
    return w, b


if __name__ == "__main__":
    # Shapes consistent with the module:
    #   inputDimensions = 32, outputDimensions = 320
    #   -> fc1: 32 -> 64, fc2: 64 -> 32, fc3: 32 -> 320
    input_dims = 32
    output_dims = 320
    batch = 256        # multiple of the batch tile; yields 2 grid steps (v7x megacore)

    key = jax.random.PRNGKey(0)
    kx, k1, k2, k3 = jax.random.split(key, 4)

    x = jax.random.normal(kx, (batch, input_dims), jnp.float32)
    w1, b1 = init_linear_params(k1, input_dims, output_dims // 5)
    w2, b2 = init_linear_params(k2, output_dims // 5, output_dims // 10)
    w3, b3 = init_linear_params(k3, output_dims // 10, output_dims)

    # Pure-JAX reference of the same forward pass.
    h1 = jnp.maximum(x @ w1 + b1, 0.0)
    h2 = jnp.maximum(h1 @ w2 + b2, 0.0)
    y_ref = 255.0 * jax.nn.sigmoid(h2 @ w3 + b3)

    # f32 I/O path: bit-accurate check.
    y = photo_mlp_forward(x, w1, b1, w2, b2, w3, b3)
    y = jax.block_until_ready(y)
    assert y.shape == (batch, output_dims)
    assert jnp.allclose(y, y_ref, atol=1e-3, rtol=1e-3)

    # bf16 I/O path (halved HBM traffic): loose check, output is in [0, 255].
    y_bf16 = photo_mlp_forward(x, w1, b1, w2, b2, w3, b3,
                               io_dtype=jnp.bfloat16)
    y_bf16 = jax.block_until_ready(y_bf16)
    assert y_bf16.shape == (batch, output_dims)
    assert jnp.max(jnp.abs(y_bf16.astype(jnp.float32) - y_ref)) < 4.0

    print("KERNEL_OK")
</pallas_src>

<mosaic_0001>
module attributes {stable_mosaic.version = 11 : i64} {
  func.func @photo_mlp_kernel(%arg0: i32, %arg1: memref<128x32xf32, #tpu.memory_space<vmem>>, %arg2: memref<32x64xf32, #tpu.memory_space<vmem>>, %arg3: memref<1x64xf32, #tpu.memory_space<vmem>>, %arg4: memref<64x32xf32, #tpu.memory_space<vmem>>, %arg5: memref<1x32xf32, #tpu.memory_space<vmem>>, %arg6: memref<32x320xf32, #tpu.memory_space<vmem>>, %arg7: memref<1x320xf32, #tpu.memory_space<vmem>>, %arg8: memref<128x320xf32, #tpu.memory_space<vmem>>) attributes {dimension_semantics = [#tpu.dimension_semantics<parallel>], iteration_bounds = array<i64: 2>, scalar_prefetch = 0 : i64, scratch_operands = 0 : i64, tpu.core_type = #tpu.core_type<tc>, window_params = [{transform_indices = @transform_0, window_bounds = array<i64: 128, 32>}, {pipeline_mode = #tpu.pipeline_mode<synchronous>, transform_indices = @transform_1, window_bounds = array<i64: 32, 64>}, {pipeline_mode = #tpu.pipeline_mode<synchronous>, transform_indices = @transform_2, window_bounds = array<i64: 1, 64>}, {pipeline_mode = #tpu.pipeline_mode<synchronous>, transform_indices = @transform_3, window_bounds = array<i64: 64, 32>}, {pipeline_mode = #tpu.pipeline_mode<synchronous>, transform_indices = @transform_4, window_bounds = array<i64: 1, 32>}, {pipeline_mode = #tpu.pipeline_mode<synchronous>, transform_indices = @transform_5, window_bounds = array<i64: 32, 320>}, {pipeline_mode = #tpu.pipeline_mode<synchronous>, transform_indices = @transform_6, window_bounds = array<i64: 1, 320>}, {transform_indices = @transform_7, window_bounds = array<i64: 128, 320>}]} {
    %c0 = arith.constant 0 : index
    %c0_0 = arith.constant 0 : index
    %0 = vector.load %arg1[%c0, %c0_0] : memref<128x32xf32, #tpu.memory_space<vmem>>, vector<128x32xf32>
    %c0_1 = arith.constant 0 : index
    %c0_2 = arith.constant 0 : index
    %1 = vector.load %arg2[%c0_1, %c0_2] : memref<32x64xf32, #tpu.memory_space<vmem>>, vector<32x64xf32>
    %cst = arith.constant dense<0.000000e+00> : vector<128x64xf32>
    %2 = tpu.matmul %0, %1, %cst {dimension_numbers = #tpu.dot_dimension_numbers<[1], [0], [0], [1], [0, 0, 1, 1], [], []>} : vector<128x32xf32>, vector<32x64xf32>, vector<128x64xf32> -> vector<128x64xf32>
    %c0_3 = arith.constant 0 : index
    %c0_4 = arith.constant 0 : index
    %3 = vector.load %arg3[%c0_3, %c0_4] : memref<1x64xf32, #tpu.memory_space<vmem>>, vector<1x64xf32>
    %4 = vector.broadcast %3 : vector<1x64xf32> to vector<128x64xf32>
    %5 = arith.addf %2, %4 : vector<128x64xf32>
    %cst_5 = arith.constant 0.000000e+00 : f32
    %6 = vector.broadcast %cst_5 : f32 to vector<128x64xf32>
    %7 = arith.maximumf %5, %6 : vector<128x64xf32>
    %c0_6 = arith.constant 0 : index
    %c0_7 = arith.constant 0 : index
    %8 = vector.load %arg4[%c0_6, %c0_7] : memref<64x32xf32, #tpu.memory_space<vmem>>, vector<64x32xf32>
    %cst_8 = arith.constant dense<0.000000e+00> : vector<128x32xf32>
    %9 = tpu.matmul %7, %8, %cst_8 {dimension_numbers = #tpu.dot_dimension_numbers<[1], [0], [0], [1], [0, 0, 1, 1], [], []>} : vector<128x64xf32>, vector<64x32xf32>, vector<128x32xf32> -> vector<128x32xf32>
    %c0_9 = arith.constant 0 : index
    %c0_10 = arith.constant 0 : index
    %10 = vector.load %arg5[%c0_9, %c0_10] : memref<1x32xf32, #tpu.memory_space<vmem>>, vector<1x32xf32>
    %11 = vector.broadcast %10 : vector<1x32xf32> to vector<128x32xf32>
    %12 = arith.addf %9, %11 : vector<128x32xf32>
    %cst_11 = arith.constant 0.000000e+00 : f32
    %13 = vector.broadcast %cst_11 : f32 to vector<128x32xf32>
    %14 = arith.maximumf %12, %13 : vector<128x32xf32>
    %c0_12 = arith.constant 0 : index
    %c0_13 = arith.constant 0 : index
    %15 = vector.load %arg6[%c0_12, %c0_13] : memref<32x320xf32, #tpu.memory_space<vmem>>, vector<32x320xf32>
    %cst_14 = arith.constant dense<0.000000e+00> : vector<128x320xf32>
    %16 = tpu.matmul %14, %15, %cst_14 {dimension_numbers = #tpu.dot_dimension_numbers<[1], [0], [0], [1], [0, 0, 1, 1], [], []>} : vector<128x32xf32>, vector<32x320xf32>, vector<128x320xf32> -> vector<128x320xf32>
    %c0_15 = arith.constant 0 : index
    %c0_16 = arith.constant 0 : index
    %17 = vector.load %arg7[%c0_15, %c0_16] : memref<1x320xf32, #tpu.memory_space<vmem>>, vector<1x320xf32>
    %18 = vector.broadcast %17 : vector<1x320xf32> to vector<128x320xf32>
    %19 = arith.addf %16, %18 : vector<128x320xf32>
    %20 = arith.negf %19 : vector<128x320xf32>
    %21 = math.exp %20 : vector<128x320xf32>
    %cst_17 = arith.constant 1.000000e+00 : f32
    %22 = vector.broadcast %cst_17 : f32 to vector<128x320xf32>
    %23 = arith.addf %22, %21 : vector<128x320xf32>
    %24 = arith.divf %22, %23 : vector<128x320xf32>
    %cst_18 = arith.constant 2.550000e+02 : f32
    %25 = vector.broadcast %cst_18 : f32 to vector<128x320xf32>
    %26 = arith.mulf %25, %24 : vector<128x320xf32>
    %c0_19 = arith.constant 0 : index
    %c0_20 = arith.constant 0 : index
    %27 = vector.load %arg8[%c0_19, %c0_20] : memref<128x320xf32, #tpu.memory_space<vmem>>, vector<128x320xf32>
    tpu.vector_store %arg8[%c0_19, %c0_20], %26 {strides = array<i32>} : memref<128x320xf32, #tpu.memory_space<vmem>>, vector<128x320xf32>,
    return
  }
  func.func @transform_0(%arg0: i32) -> (i32, i32) {
    %c0_i32 = arith.constant 0 : i32
    %c0_i32_0 = arith.constant 0 : i32
    return %arg0, %c0_i32 : i32, i32
  }
  func.func @transform_1(%arg0: i32) -> (i32, i32) {
    %c0_i32 = arith.constant 0 : i32
    %c0_i32_0 = arith.constant 0 : i32
    %c0_i32_1 = arith.constant 0 : i32
    return %c0_i32, %c0_i32_0 : i32, i32
  }
  func.func @transform_2(%arg0: i32) -> (i32, i32) {
    %c0_i32 = arith.constant 0 : i32
    %c0_i32_0 = arith.constant 0 : i32
    %c0_i32_1 = arith.constant 0 : i32
    return %c0_i32, %c0_i32_0 : i32, i32
  }
  func.func @transform_3(%arg0: i32) -> (i32, i32) {
    %c0_i32 = arith.constant 0 : i32
    %c0_i32_0 = arith.constant 0 : i32
    %c0_i32_1 = arith.constant 0 : i32
    return %c0_i32, %c0_i32_0 : i32, i32
  }
  func.func @transform_4(%arg0: i32) -> (i32, i32) {
    %c0_i32 = arith.constant 0 : i32
    %c0_i32_0 = arith.constant 0 : i32
    %c0_i32_1 = arith.constant 0 : i32
    return %c0_i32, %c0_i32_0 : i32, i32
  }
  func.func @transform_5(%arg0: i32) -> (i32, i32) {
    %c0_i32 = arith.constant 0 : i32
    %c0_i32_0 = arith.constant 0 : i32
    %c0_i32_1 = arith.constant 0 : i32
    return %c0_i32, %c0_i32_0 : i32, i32
  }
  func.func @transform_6(%arg0: i32) -> (i32, i32) {
    %c0_i32 = arith.constant 0 : i32
    %c0_i32_0 = arith.constant 0 : i32
    %c0_i32_1 = arith.constant 0 : i32
    return %c0_i32, %c0_i32_0 : i32, i32
  }
  func.func @transform_7(%arg0: i32) -> (i32, i32) {
    %c0_i32 = arith.constant 0 : i32
    %c0_i32_0 = arith.constant 0 : i32
    return %arg0, %c0_i32 : i32, i32
  }
}

</mosaic_0001>

<llo_original>
// kernel: photo_mlp_forward.1
$region0: #{photo_mlp_forward.1}
  #allocation0 [shape = 'u32[]', space=smem, size = 0x4, offset = 0x4, fixed_abs, tag = 'smem constant byte address 0x4 - core index']
  #allocation1 [shape = 'u32[72,128]{1,0:T(1,128)}', space=vmem, size = 0x9000, scoped, tag = 'internal scratch']
  %s0 = inlined_call_operand.vmem [shape: f32[256,32], index: 0, kind: input, shape index: {}]
  %s1 = inlined_call_operand.vmem [shape: f32[32,64], index: 1, kind: input, shape index: {}]
  %s2 = inlined_call_operand.vmem [shape: f32[1,64], index: 2, kind: input, shape index: {}]
  %s3 = inlined_call_operand.vmem [shape: f32[64,32], index: 3, kind: input, shape index: {}]
  %s4 = inlined_call_operand.vmem [shape: f32[1,32], index: 4, kind: input, shape index: {}]
  %s5 = inlined_call_operand.vmem [shape: f32[32,320], index: 5, kind: input, shape index: {}]
  %s6 = inlined_call_operand.vmem [shape: f32[1,320], index: 6, kind: input, shape index: {}]
  %s7 = inlined_call_operand.vmem [shape: f32[256,320], index: 7, kind: output, shape index: {}]
  %s8 = sld [smem:[#allocation0]]
  $region61: #{photo_mlp_forward.1} parent=0
    _
  %s10 = ssub.s32 1, %s8
  %s11 = scalar_select 0, %s10, %s8
  loop: start=0, step=1, limit=4
  $region2: #{photo_mlp_forward.1} parent=0 // loop_pre_header
    _
  $region3: #{photo_mlp_forward.1} parent=0 // loop_header
    %s13 = sphi 0, %s17
    %p14 = scmp.ge.s32.totalorder %s13, 4
    %s23 = sphi 0, %s25
    %s26 = sphi 0, %s23
    %s27 = sphi 0, %s26
    %s43 = sphi 0, %s27
    %s47 = sphi 0, %s47
    %s49 = sphi 0, %s47
    %s50 = sphi 0, %s49
    %s64 = sphi 0, %s50
    %s68 = sphi 0, %s68
    %s70 = sphi 0, %s68
    %s71 = sphi 0, %s70
    %s85 = sphi 0, %s71
    %s89 = sphi 0, %s89
    %s91 = sphi 0, %s89
    %s92 = sphi 0, %s91
    %s106 = sphi 0, %s92
    %s110 = sphi 0, %s110
    %s112 = sphi 0, %s110
    %s113 = sphi 0, %s112
    %s127 = sphi 0, %s113
    %s131 = sphi 0, %s131
    %s133 = sphi 0, %s131
    %s134 = sphi 0, %s133
    %s148 = sphi 0, %s134
    %s152 = sphi 0, %s152
    %s154 = sphi 0, %s152
    %s155 = sphi 0, %s154
    %s169 = sphi 0, %s155
    %s175 = sphi 0, %s177
    %s178 = sphi 0, %s175
    %s179 = sphi 0, %s178
    %s195 = sphi 0, %s179
  $region4: #{photo_mlp_forward.1} parent=0 // loop_header_branch
    %16 = sbr.rel (%p14) target = $region8
  $region5: #{photo_mlp_forward.1} parent=0 // loop_body
    %s18 = ssub.s32 %s13, 1
    %s19 = ssub.s32 %s13, 2
    %s20 = sadd.s32 %s13, 1
    %s21 = ssub.s32 %s13, %s20
    %p22 = scmp.eq.s32.totalorder %s21, 0
    %s24 = sadd.s32 %s23, 1
    %s25 = scalar_select %p22, %s23, %s24
    %p28 = pneg %p22
    %p29 = scmp.eq.s32.totalorder %s13, 1
    %p30 = por %p28, %p29
    %p31 = scmp.ne.s32.totalorder %s23, %s26
    %p32 = scmp.eq.s32.totalorder %s13, 0
    %p33 = por %p31, %p32
    %p34 = scmp.ne.s32.totalorder %s23, %s26
    %p35 = scmp.eq.s32.totalorder %s18, 1
    %p36 = por %p34, %p35
    %p37 = scmp.ne.s32.totalorder %s26, %s27
    %p38 = scmp.eq.s32.totalorder %s18, 0
    %p39 = por %p37, %p38
    %p40 = scmp.ne.s32.totalorder %s26, %s27
    %p41 = scmp.eq.s32.totalorder %s19, 1
    %p42 = por %p40, %p41
    %p44 = scmp.ne.s32.totalorder %s27, %s43
    %p45 = scmp.eq.s32.totalorder %s19, 0
    %p46 = por %p44, %p45
    %s48 = sadd.s32 %s47, 1
    %p51 = scmp.eq.s32.totalorder %s13, 1
    %p52 = scmp.ne.s32.totalorder %s47, %s49
    %p53 = scmp.eq.s32.totalorder %s13, 0
    %p54 = por %p52, %p53
    %p55 = scmp.ne.s32.totalorder %s47, %s49
    %p56 = scmp.eq.s32.totalorder %s18, 1
    %p57 = por %p55, %p56
    %p58 = scmp.ne.s32.totalorder %s49, %s50
    %p59 = scmp.eq.s32.totalorder %s18, 0
    %p60 = por %p58, %p59
    %p61 = scmp.ne.s32.totalorder %s49, %s50
    %p62 = scmp.eq.s32.totalorder %s19, 1
    %p63 = por %p61, %p62
    %p65 = scmp.ne.s32.totalorder %s50, %s64
    %p66 = scmp.eq.s32.totalorder %s19, 0
    %p67 = por %p65, %p66
    %s69 = sadd.s32 %s68, 1
    %p72 = scmp.eq.s32.totalorder %s13, 1
    %p73 = scmp.ne.s32.totalorder %s68, %s70
    %p74 = scmp.eq.s32.totalorder %s13, 0
    %p75 = por %p73, %p74
    %p76 = scmp.ne.s32.totalorder %s68, %s70
    %p77 = scmp.eq.s32.totalorder %s18, 1
    %p78 = por %p76, %p77
    %p79 = scmp.ne.s32.totalorder %s70, %s71
    %p80 = scmp.eq.s32.totalorder %s18, 0
    %p81 = por %p79, %p80
    %p82 = scmp.ne.s32.totalorder %s70, %s71
    %p83 = scmp.eq.s32.totalorder %s19, 1
    %p84 = por %p82, %p83
    %p86 = scmp.ne.s32.totalorder %s71, %s85
    %p87 = scmp.eq.s32.totalorder %s19, 0
    %p88 = por %p86, %p87
    %s90 = sadd.s32 %s89, 1
    %p93 = scmp.eq.s32.totalorder %s13, 1
    %p94 = scmp.ne.s32.totalorder %s89, %s91
    %p95 = scmp.eq.s32.totalorder %s13, 0
    %p96 = por %p94, %p95
    %p97 = scmp.ne.s32.totalorder %s89, %s91
    %p98 = scmp.eq.s32.totalorder %s18, 1
    %p99 = por %p97, %p98
    %p100 = scmp.ne.s32.totalorder %s91, %s92
    %p101 = scmp.eq.s32.totalorder %s18, 0
    %p102 = por %p100, %p101
    %p103 = scmp.ne.s32.totalorder %s91, %s92
    %p104 = scmp.eq.s32.totalorder %s19, 1
    %p105 = por %p103, %p104
    %p107 = scmp.ne.s32.totalorder %s92, %s106
    %p108 = scmp.eq.s32.totalorder %s19, 0
    %p109 = por %p107, %p108
    %s111 = sadd.s32 %s110, 1
    %p114 = scmp.eq.s32.totalorder %s13, 1
    %p115 = scmp.ne.s32.totalorder %s110, %s112
    %p116 = scmp.eq.s32.totalorder %s13, 0
    %p117 = por %p115, %p116
    %p118 = scmp.ne.s32.totalorder %s110, %s112
    %p119 = scmp.eq.s32.totalorder %s18, 1
    %p120 = por %p118, %p119
    %p121 = scmp.ne.s32.totalorder %s112, %s113
    %p122 = scmp.eq.s32.totalorder %s18, 0
    %p123 = por %p121, %p122
    %p124 = scmp.ne.s32.totalorder %s112, %s113
    %p125 = scmp.eq.s32.totalorder %s19, 1
    %p126 = por %p124, %p125
    %p128 = scmp.ne.s32.totalorder %s113, %s127
    %p129 = scmp.eq.s32.totalorder %s19, 0
    %p130 = por %p128, %p129
    %s132 = sadd.s32 %s131, 1
    %p135 = scmp.eq.s32.totalorder %s13, 1
    %p136 = scmp.ne.s32.totalorder %s131, %s133
    %p137 = scmp.eq.s32.totalorder %s13, 0
    %p138 = por %p136, %p137
    %p139 = scmp.ne.s32.totalorder %s131, %s133
    %p140 = scmp.eq.s32.totalorder %s18, 1
    %p141 = por %p139, %p140
    %p142 = scmp.ne.s32.totalorder %s133, %s134
    %p143 = scmp.eq.s32.totalorder %s18, 0
    %p144 = por %p142, %p143
    %p145 = scmp.ne.s32.totalorder %s133, %s134
    %p146 = scmp.eq.s32.totalorder %s19, 1
    %p147 = por %p145, %p146
    %p149 = scmp.ne.s32.totalorder %s134, %s148
    %p150 = scmp.eq.s32.totalorder %s19, 0
    %p151 = por %p149, %p150
    %s153 = sadd.s32 %s152, 1
    %p156 = scmp.eq.s32.totalorder %s13, 1
    %p157 = scmp.ne.s32.totalorder %s152, %s154
    %p158 = scmp.eq.s32.totalorder %s13, 0
    %p159 = por %p157, %p158
    %p160 = scmp.ne.s32.totalorder %s152, %s154
    %p161 = scmp.eq.s32.totalorder %s18, 1
    %p162 = por %p160, %p161
    %p163 = scmp.ne.s32.totalorder %s154, %s155
    %p164 = scmp.eq.s32.totalorder %s18, 0
    %p165 = por %p163, %p164
    %p166 = scmp.ne.s32.totalorder %s154, %s155
    %p167 = scmp.eq.s32.totalorder %s19, 1
    %p168 = por %p166, %p167
    %p170 = scmp.ne.s32.totalorder %s155, %s169
    %p171 = scmp.eq.s32.totalorder %s19, 0
    %p172 = por %p170, %p171
    %s173 = ssub.s32 %s13, %s20
    %p174 = scmp.eq.s32.totalorder %s173, 0
    %s176 = sadd.s32 %s175, 1
    %s177 = scalar_select %p174, %s175, %s176
    %p180 = pneg %p174
    %p181 = scmp.eq.s32.totalorder %s13, 1
    %p182 = por %p180, %p181
    %p183 = scmp.ne.s32.totalorder %s175, %s178
    %p184 = scmp.eq.s32.totalorder %s13, 0
    %p185 = por %p183, %p184
    %p186 = scmp.ne.s32.totalorder %s175, %s178
    %p187 = scmp.eq.s32.totalorder %s18, 1
    %p188 = por %p186, %p187
    %p189 = scmp.ne.s32.totalorder %s178, %s179
    %p190 = scmp.eq.s32.totalorder %s18, 0
    %p191 = por %p189, %p190
    %p192 = scmp.ne.s32.totalorder %s178, %s179
    %p193 = scmp.eq.s32.totalorder %s19, 1
    %p194 = por %p192, %p193
    %p196 = scmp.ne.s32.totalorder %s179, %s195
    %p197 = scmp.eq.s32.totalorder %s19, 0
    %p198 = por %p196, %p197
    %p199 = scmp.le.s32.totalorder 1, %s13
    %p200 = scmp.lt.s32.totalorder %s13, 3
    %p201 = pnand %p199, %p200
    %p202 = pneg %p201
    // Predicated region
    $region9: #{photo_mlp_forward.1} parent=5 // pred_check
      _
    $region10: #{photo_mlp_forward.1} parent=5 // pred_check_branch
      %204 = sbr.rel (%p201) target = $region12
    $region11: #{photo_mlp_forward.1} parent=5 // pred_region
      %s205 = ssub.s32 %s13, 1
      // Predicated region
      $region13: #{photo_mlp_forward.1} parent=11 // pred_check
        %p206 = pneg %p60
      $region14: #{photo_mlp_forward.1} parent=11 // pred_check_branch
        %208 = sbr.rel (%p206) target = $region16
      $region15: #{photo_mlp_forward.1} parent=11 // pred_region
        _
      $region16: #{photo_mlp_forward.1} parent=11 // pred_fallthru
        _
      // Predicated region
      $region17: #{photo_mlp_forward.1} parent=11 // pred_check
        %p209 = pneg %p81
      $region18: #{photo_mlp_forward.1} parent=11 // pred_check_branch
        %211 = sbr.rel (%p209) target = $region20
      $region19: #{photo_mlp_forward.1} parent=11 // pred_region
        _
      $region20: #{photo_mlp_forward.1} parent=11 // pred_fallthru
        _
      // Predicated region
      $region21: #{photo_mlp_forward.1} parent=11 // pred_check
        %p212 = pneg %p102
      $region22: #{photo_mlp_forward.1} parent=11 // pred_check_branch
        %214 = sbr.rel (%p212) target = $region24
      $region23: #{photo_mlp_forward.1} parent=11 // pred_region
        _
      $region24: #{photo_mlp_forward.1} parent=11 // pred_fallthru
        _
      // Predicated region
      $region25: #{photo_mlp_forward.1} parent=11 // pred_check
        %p215 = pneg %p123
      $region26: #{photo_mlp_forward.1} parent=11 // pred_check_branch
        %217 = sbr.rel (%p215) target = $region28
      $region27: #{photo_mlp_forward.1} parent=11 // pred_region
        _
      $region28: #{photo_mlp_forward.1} parent=11 // pred_fallthru
        _
      // Predicated region
      $region29: #{photo_mlp_forward.1} parent=11 // pred_check
        %p218 = pneg %p144
      $region30: #{photo_mlp_forward.1} parent=11 // pred_check_branch
        %220 = sbr.rel (%p218) target = $region32
      $region31: #{photo_mlp_forward.1} parent=11 // pred_region
        _
      $region32: #{photo_mlp_forward.1} parent=11 // pred_fallthru
        _
      // Predicated region
      $region33: #{photo_mlp_forward.1} parent=11 // pred_check
        %p221 = pneg %p165
      $region34: #{photo_mlp_forward.1} parent=11 // pred_check_branch
        %223 = sbr.rel (%p221) target = $region36
      $region35: #{photo_mlp_forward.1} parent=11 // pred_region
        _
      $region36: #{photo_mlp_forward.1} parent=11 // pred_fallthru
        _
    $region12: #{photo_mlp_forward.1} parent=5 // pred_fallthru
      _
    %p224 = scmp.lt.s32.totalorder %s13, 2
    // Predicated region
    $region37: #{photo_mlp_forward.1} parent=5 // pred_check
      %p225 = pneg %p224
    $region38: #{photo_mlp_forward.1} parent=5 // pred_check_branch
      %227 = sbr.rel (%p225) target = $region40
    $region39: #{photo_mlp_forward.1} parent=5 // pred_region
      // Predicated region
      $region41: #{photo_mlp_forward.1} parent=39 // pred_check
        %p228 = pneg %p33
      $region42: #{photo_mlp_forward.1} parent=39 // pred_check_branch
        %230 = sbr.rel (%p228) target = $region44
      $region43: #{photo_mlp_forward.1} parent=39 // pred_region
        %s231 = smul.u32 16, %s13
        %p232 = scmp.lt.s32.totalorder %s231, 31
        %s233 = scalar_select %p232, %s231, 31
        %s234 = smul.addr %s233, 8
        %s235 = scalar_lea.vmem %s0, %s234
        %s236 = smul.u32 16, %s13
      $region44: #{photo_mlp_forward.1} parent=39 // pred_fallthru
        _
    $region40: #{photo_mlp_forward.1} parent=5 // pred_fallthru
      _
    %p237 = scmp.le.s32.totalorder 1, %s13
    %p238 = scmp.lt.s32.totalorder %s13, 3
    %p239 = pnand %p237, %p238
    %p240 = pneg %p239
    // Predicated region
    $region45: #{photo_mlp_forward.1} parent=5 // pred_check
      _
    $region46: #{photo_mlp_forward.1} parent=5 // pred_check_branch
      %242 = sbr.rel (%p239) target = $region48
    $region47: #{photo_mlp_forward.1} parent=5 // pred_region
      %s243 = ssub.s32 %s13, 1
      %s244 = smul.u32 16, %s18
      %p245 = scmp.lt.s32.totalorder %s244, 31
      %s246 = scalar_select %p245, %s244, 31
      %s247 = smul.addr %s246, 8
      %s248 = scalar_lea.vmem %s0, %s247
      %p249 = pneg %p39
      %p250 = pneg %p36
      %p251 = pneg %p60
      %p252 = pneg %p57
      %p253 = pneg %p81
      %p254 = pneg %p78
      %p255 = pneg %p102
      %p256 = pneg %p99
      %p257 = pneg %p123
      %p258 = pneg %p120
      %p259 = pneg %p144
      %p260 = pneg %p141
      %p261 = pneg %p165
      %p262 = pneg %p162
      %p263 = pneg %p191
      %p264 = pneg %p188
      %s265 = smul.u32 16, %s18
      %p266 = scmp.lt.s32.totalorder %s265, 31
      %s267 = scalar_select %p266, %s265, 31
      %s268 = smul.addr %s267, 3
      %s269 = smul.addr %s268, 8
      %s270 = scalar_lea.vmem %s7, %s269
      %s271 = smul.u32 16, %s18
      %p272 = scmp.lt.s32.totalorder %s271, 31
      %s273 = scalar_select %p272, %s271, 31
      %s274 = smul.addr %s273, 8
      %s275 = scalar_lea.vmem %s0, %s274
      %s276 = smul.u32 16, %s18
      %s277 = smul.u32 16, %s18
      %p278 = scmp.lt.s32.totalorder %s277, 31
      %s279 = scalar_select %p278, %s277, 31
      %s280 = smul.addr %s279, 3
      %s281 = smul.addr %s280, 8
      %s282 = scalar_lea.vmem %s7, %s281
      %s283 = smul.u32 16, %s18
      %v284 = vld [vmem:[%s275] sm:$0xff]
      %v285 = vld [vmem:[%s275 + $0x8] sm:$0xff]
      %v286 = vld [vmem:[%s275 + $0x10] sm:$0xff]
      %v287 = vld [vmem:[%s275 + $0x18] sm:$0xff]
      %v288 = vld [vmem:[%s275 + $0x20] sm:$0xff]
      %v289 = vld [vmem:[%s275 + $0x28] sm:$0xff]
      %v290 = vld [vmem:[%s275 + $0x30] sm:$0xff]
      %v291 = vld [vmem:[%s275 + $0x38] sm:$0xff]
      %v292 = vld [vmem:[%s275 + $0x40] sm:$0xff]
      %v293 = vld [vmem:[%s275 + $0x48] sm:$0xff]
      %v294 = vld [vmem:[%s275 + $0x50] sm:$0xff]
      %v295 = vld [vmem:[%s275 + $0x58] sm:$0xff]
      %v296 = vld [vmem:[%s275 + $0x60] sm:$0xff]
      %v297 = vld [vmem:[%s275 + $0x68] sm:$0xff]
      %v298 = vld [vmem:[%s275 + $0x70] sm:$0xff]
      %v299 = vld [vmem:[%s275 + $0x78] sm:$0xff]
      %v300 = vld [vmem:[%s1] sm:$0xff]
      %v301 = vld [vmem:[%s1 + $0x8] sm:$0xff]
      %v302 = vld [vmem:[%s1 + $0x10] sm:$0xff]
      %v303 = vld [vmem:[%s1 + $0x18] sm:$0xff]
      %v304 = vld [vmem:[%s2] sm:$0x1]
      %v306 = vperm.slane %v304, 0
      %vm308 = vcmask 261120
      %v310 = vsel %vm308, %v284, 0
      %v313 = vsel %vm308, %v285, 0
      %v316 = vsel %vm308, %v286, 0
      %v319 = vsel %vm308, %v287, 0
      %v322 = vsel %vm308, %v288, 0
      %v325 = vsel %vm308, %v289, 0
      %v328 = vsel %vm308, %v290, 0
      %v331 = vsel %vm308, %v291, 0
      %v334 = vsel %vm308, %v292, 0
      %v337 = vsel %vm308, %v293, 0
      %v340 = vsel %vm308, %v294, 0
      %v343 = vsel %vm308, %v295, 0
      %v346 = vsel %vm308, %v296, 0
      %v349 = vsel %vm308, %v297, 0
      %v352 = vsel %vm308, %v298, 0
      %v355 = vsel %vm308, %v299, 0
      %357 = vmatpush.msra.mxu0 0.0
      %358 = vmatpush.msra.mxu0 0.0
      %359 = vmatpush.msra.mxu0 0.0
      %360 = vmatpush.msra.mxu0 0.0
      %361 = vmatpush.msra.mxu0 0.0
      %362 = vmatpush.msra.mxu0 0.0
      %363 = vmatpush.msra.mxu0 0.0
      %364 = vmatpush.msra.mxu0 0.0
      %365 = vmatpush.msra.mxu0 0.0
      %366 = vmatpush.msra.mxu0 0.0
      %367 = vmatpush.msra.mxu0 0.0
      %368 = vmatpush.msra.mxu0 0.0
      %369 = vmatpush.msra.mxu0 %v303
      %370 = vmatpush.msra.mxu0 %v302
      %371 = vmatpush.msra.mxu0 %v301
      %372 = vmatpush.msra.mxu0 %v300
      %373 = vmatmul.f32.gmra.mxu0 %v310
      %v374 = vpop.f32.mrf.mxu0
      %v375 = vadd.f32 %v306, %v374
      %376 = vmatmul.f32.gmra.mxu0 %v313
      %v377 = vpop.f32.mrf.mxu0
      %v378 = vadd.f32 %v306, %v377
      %379 = vmatmul.f32.gmra.mxu0 %v316
      %v380 = vpop.f32.mrf.mxu0
      %v381 = vadd.f32 %v306, %v380
      %382 = vmatmul.f32.gmra.mxu0 %v319
      %v383 = vpop.f32.mrf.mxu0
      %v384 = vadd.f32 %v306, %v383
      %385 = vmatmul.f32.gmra.mxu0 %v322
      %v386 = vpop.f32.mrf.mxu0
      %v387 = vadd.f32 %v306, %v386
      %388 = vmatmul.f32.gmra.mxu0 %v325
      %v389 = vpop.f32.mrf.mxu0
      %v390 = vadd.f32 %v306, %v389
      %391 = vmatmul.f32.gmra.mxu0 %v328
      %v392 = vpop.f32.mrf.mxu0
      %v393 = vadd.f32 %v306, %v392
      %394 = vmatmul.f32.gmra.mxu0 %v331
      %v395 = vpop.f32.mrf.mxu0
      %v396 = vadd.f32 %v306, %v395
      %397 = vmatmul.f32.gmra.mxu0 %v334
      %v398 = vpop.f32.mrf.mxu0
      %v399 = vadd.f32 %v306, %v398
      %400 = vmatmul.f32.gmra.mxu0 %v337
      %v401 = vpop.f32.mrf.mxu0
      %v402 = vadd.f32 %v306, %v401
      %403 = vmatmul.f32.gmra.mxu0 %v340
      %v404 = vpop.f32.mrf.mxu0
      %v405 = vadd.f32 %v306, %v404
      %406 = vmatmul.f32.gmra.mxu0 %v343
      %v407 = vpop.f32.mrf.mxu0
      %v408 = vadd.f32 %v306, %v407
      %409 = vmatmul.f32.gmra.mxu0 %v346
      %v410 = vpop.f32.mrf.mxu0
      %v411 = vadd.f32 %v306, %v410
      %412 = vmatmul.f32.gmra.mxu0 %v349
      %v413 = vpop.f32.mrf.mxu0
      %v414 = vadd.f32 %v306, %v413
      %415 = vmatmul.f32.gmra.mxu0 %v352
      %v416 = vpop.f32.mrf.mxu0
      %v417 = vadd.f32 %v306, %v416
      %418 = vmatmul.f32.gmra.mxu0 %v355
      %v419 = vpop.f32.mrf.mxu0
      %v420 = vadd.f32 %v306, %v419
      %421 = vdwg.mxu0
      %v422 = vmax.f32 %v375, 0.0
      %v423 = vmax.f32 %v378, 0.0
      %v424 = vmax.f32 %v381, 0.0
      %v425 = vmax.f32 %v384, 0.0
      %v426 = vmax.f32 %v387, 0.0
      %v427 = vmax.f32 %v390, 0.0
      %v428 = vmax.f32 %v393, 0.0
      %v429 = vmax.f32 %v396, 0.0
      %v430 = vmax.f32 %v399, 0.0
      %v431 = vmax.f32 %v402, 0.0
      %v432 = vmax.f32 %v405, 0.0
      %v433 = vmax.f32 %v408, 0.0
      %v434 = vmax.f32 %v411, 0.0
      %v435 = vmax.f32 %v414, 0.0
      %v436 = vmax.f32 %v417, 0.0
      %v437 = vmax.f32 %v420, 0.0
      %v438 = vld [vmem:[%s3] sm:$0xff]
      %v439 = vld [vmem:[%s3 + $0x8] sm:$0xff]
      %v440 = vld [vmem:[%s3 + $0x10] sm:$0xff]
      %v441 = vld [vmem:[%s3 + $0x18] sm:$0xff]
      %v442 = vld [vmem:[%s3 + $0x20] sm:$0xff]
      %v443 = vld [vmem:[%s3 + $0x28] sm:$0xff]
      %v444 = vld [vmem:[%s3 + $0x30] sm:$0xff]
      %v445 = vld [vmem:[%s3 + $0x38] sm:$0xff]
      %v446 = vld [vmem:[%s4] sm:$0x1]
      %v448 = vperm.slane %v446, 0
      %vm450 = vcmask 523264
      %v452 = vsel %vm450, %v422, 0
      %v455 = vsel %vm450, %v423, 0
      %v458 = vsel %vm450, %v424, 0
      %v461 = vsel %vm450, %v425, 0
      %v464 = vsel %vm450, %v426, 0
      %v467 = vsel %vm450, %v427, 0
      %v470 = vsel %vm450, %v428, 0
      %v473 = vsel %vm450, %v429, 0
      %v476 = vsel %vm450, %v430, 0
      %v479 = vsel %vm450, %v431, 0
      %v482 = vsel %vm450, %v432, 0
      %v485 = vsel %vm450, %v433, 0
      %v488 = vsel %vm450, %v434, 0
      %v491 = vsel %vm450, %v435, 0
      %v494 = vsel %vm450, %v436, 0
      %v497 = vsel %vm450, %v437, 0
      %499 = vmatpush.msra.mxu0 0.0
      %500 = vmatpush.msra.mxu0 0.0
      %501 = vmatpush.msra.mxu0 0.0
      %502 = vmatpush.msra.mxu0 0.0
      %503 = vmatpush.msra.mxu0 0.0
      %504 = vmatpush.msra.mxu0 0.0
      %505 = vmatpush.msra.mxu0 0.0
      %506 = vmatpush.msra.mxu0 0.0
      %507 = vmatpush.msra.mxu0 %v445
      %508 = vmatpush.msra.mxu0 %v444
      %509 = vmatpush.msra.mxu0 %v443
      %510 = vmatpush.msra.mxu0 %v442
      %511 = vmatpush.msra.mxu0 %v441
      %512 = vmatpush.msra.mxu0 %v440
      %513 = vmatpush.msra.mxu0 %v439
      %514 = vmatpush.msra.mxu0 %v438
      %515 = vmatmul.f32.gmra.mxu0 %v452
      %v516 = vpop.f32.mrf.mxu0
      %v517 = vadd.f32 %v448, %v516
      %518 = vmatmul.f32.gmra.mxu0 %v455
      %v519 = vpop.f32.mrf.mxu0
      %v520 = vadd.f32 %v448, %v519
      %521 = vmatmul.f32.gmra.mxu0 %v458
      %v522 = vpop.f32.mrf.mxu0
      %v523 = vadd.f32 %v448, %v522
      %524 = vmatmul.f32.gmra.mxu0 %v461
      %v525 = vpop.f32.mrf.mxu0
      %v526 = vadd.f32 %v448, %v525
      %527 = vmatmul.f32.gmra.mxu0 %v464
      %v528 = vpop.f32.mrf.mxu0
      %v529 = vadd.f32 %v448, %v528
      %530 = vmatmul.f32.gmra.mxu0 %v467
      %v531 = vpop.f32.mrf.mxu0
      %v532 = vadd.f32 %v448, %v531
      %533 = vmatmul.f32.gmra.mxu0 %v470
      %v534 = vpop.f32.mrf.mxu0
      %v535 = vadd.f32 %v448, %v534
      %536 = vmatmul.f32.gmra.mxu0 %v473
      %v537 = vpop.f32.mrf.mxu0
      %v538 = vadd.f32 %v448, %v537
      %539 = vmatmul.f32.gmra.mxu0 %v476
      %v540 = vpop.f32.mrf.mxu0
      %v541 = vadd.f32 %v448, %v540
      %542 = vmatmul.f32.gmra.mxu0 %v479
      %v543 = vpop.f32.mrf.mxu0
      %v544 = vadd.f32 %v448, %v543
      %545 = vmatmul.f32.gmra.mxu0 %v482
      %v546 = vpop.f32.mrf.mxu0
      %v547 = vadd.f32 %v448, %v546
      %548 = vmatmul.f32.gmra.mxu0 %v485
      %v549 = vpop.f32.mrf.mxu0
      %v550 = vadd.f32 %v448, %v549
      %551 = vmatmul.f32.gmra.mxu0 %v488
      %v552 = vpop.f32.mrf.mxu0
      %v553 = vadd.f32 %v448, %v552
      %554 = vmatmul.f32.gmra.mxu0 %v491
      %v555 = vpop.f32.mrf.mxu0
      %v556 = vadd.f32 %v448, %v555
      %557 = vmatmul.f32.gmra.mxu0 %v494
      %v558 = vpop.f32.mrf.mxu0
      %v559 = vadd.f32 %v448, %v558
      %560 = vmatmul.f32.gmra.mxu0 %v497
      %v561 = vpop.f32.mrf.mxu0
      %v562 = vadd.f32 %v448, %v561
      %563 = vdwg.mxu0
      %v564 = vmax.f32 %v517, 0.0
      %v565 = vmax.f32 %v520, 0.0
      %v566 = vmax.f32 %v523, 0.0
      %v567 = vmax.f32 %v526, 0.0
      %v568 = vmax.f32 %v529, 0.0
      %v569 = vmax.f32 %v532, 0.0
      %v570 = vmax.f32 %v535, 0.0
      %v571 = vmax.f32 %v538, 0.0
      %v572 = vmax.f32 %v541, 0.0
      %v573 = vmax.f32 %v544, 0.0
      %v574 = vmax.f32 %v547, 0.0
      %v575 = vmax.f32 %v550, 0.0
      %v576 = vmax.f32 %v553, 0.0
      %v577 = vmax.f32 %v556, 0.0
      %v578 = vmax.f32 %v559, 0.0
      %v579 = vmax.f32 %v562, 0.0
      %v580 = vld [vmem:[%s5] sm:$0xff]
      %v581 = vld [vmem:[%s5 + $0x8] sm:$0xff]
      %v582 = vld [vmem:[%s5 + $0x10] sm:$0xff]
      %v583 = vld [vmem:[%s5 + $0x18] sm:$0xff]
      %v584 = vld [vmem:[%s5 + $0x20] sm:$0xff]
      %v585 = vld [vmem:[%s5 + $0x28] sm:$0xff]
      %v586 = vld [vmem:[%s5 + $0x30] sm:$0xff]
      %v587 = vld [vmem:[%s5 + $0x38] sm:$0xff]
      %v588 = vld [vmem:[%s5 + $0x40] sm:$0xff]
      %v589 = vld [vmem:[%s5 + $0x48] sm:$0xff]
      %v590 = vld [vmem:[%s5 + $0x50] sm:$0xff]
      %v591 = vld [vmem:[%s5 + $0x58] sm:$0xff]
      %v592 = vld [vmem:[%s6] sm:$0x7]
      %v594 = vperm.slane %v592, 0
      %v595 = vperm.slane %v592, 1
      %v596 = vperm.slane %v592, 2
      %v601 = vsel %vm308, %v564, 0
      %v604 = vsel %vm308, %v565, 0
      %v607 = vsel %vm308, %v566, 0
      %v610 = vsel %vm308, %v567, 0
      %v613 = vsel %vm308, %v568, 0
      %v616 = vsel %vm308, %v569, 0
      %v619 = vsel %vm308, %v570, 0
      %v622 = vsel %vm308, %v571, 0
      %v625 = vsel %vm308, %v572, 0
      %v628 = vsel %vm308, %v573, 0
      %v631 = vsel %vm308, %v574, 0
      %v634 = vsel %vm308, %v575, 0
      %v637 = vsel %vm308, %v576, 0
      %v640 = vsel %vm308, %v577, 0
      %v643 = vsel %vm308, %v578, 0
      %v646 = vsel %vm308, %v579, 0
      %648 = vmatpush.msra.mxu0 0.0
      %649 = vmatpush.msra.mxu0 0.0
      %650 = vmatpush.msra.mxu0 0.0
      %651 = vmatpush.msra.mxu0 0.0
      %652 = vmatpush.msra.mxu0 0.0
      %653 = vmatpush.msra.mxu0 0.0
      %654 = vmatpush.msra.mxu0 0.0
      %655 = vmatpush.msra.mxu0 0.0
      %656 = vmatpush.msra.mxu0 0.0
      %657 = vmatpush.msra.mxu0 0.0
      %658 = vmatpush.msra.mxu0 0.0
      %659 = vmatpush.msra.mxu0 0.0
      %660 = vmatpush.msra.mxu0 %v589
      %661 = vmatpush.msra.mxu0 %v586
      %662 = vmatpush.msra.mxu0 %v583
      %663 = vmatpush.msra.mxu0 %v580
      %664 = vmatmul.f32.gmra.mxu0 %v601
      %v665 = vpop.f32.mrf.mxu0
      %v666 = vadd.f32 %v594, %v665
      %667 = vmatmul.f32.gmra.mxu0 %v604
      %v668 = vpop.f32.mrf.mxu0
      %v669 = vadd.f32 %v594, %v668
      %670 = vmatmul.f32.gmra.mxu0 %v607
      %v671 = vpop.f32.mrf.mxu0
      %v672 = vadd.f32 %v594, %v671
      %673 = vmatmul.f32.gmra.mxu0 %v610
      %v674 = vpop.f32.mrf.mxu0
      %v675 = vadd.f32 %v594, %v674
      %676 = vmatmul.f32.gmra.mxu0 %v613
      %v677 = vpop.f32.mrf.mxu0
      %v678 = vadd.f32 %v594, %v677
      %679 = vmatmul.f32.gmra.mxu0 %v616
      %v680 = vpop.f32.mrf.mxu0
      %v681 = vadd.f32 %v594, %v680
      %682 = vmatmul.f32.gmra.mxu0 %v619
      %v683 = vpop.f32.mrf.mxu0
      %v684 = vadd.f32 %v594, %v683
      %685 = vmatmul.f32.gmra.mxu0 %v622
      %v686 = vpop.f32.mrf.mxu0
      %v687 = vadd.f32 %v594, %v686
      %688 = vmatmul.f32.gmra.mxu0 %v625
      %v689 = vpop.f32.mrf.mxu0
      %v690 = vadd.f32 %v594, %v689
      %691 = vmatmul.f32.gmra.mxu0 %v628
      %v692 = vpop.f32.mrf.mxu0
      %v693 = vadd.f32 %v594, %v692
      %694 = vmatmul.f32.gmra.mxu0 %v631
      %v695 = vpop.f32.mrf.mxu0
      %v696 = vadd.f32 %v594, %v695
      %697 = vmatmul.f32.gmra.mxu0 %v634
      %v698 = vpop.f32.mrf.mxu0
      %v699 = vadd.f32 %v594, %v698
      %700 = vmatmul.f32.gmra.mxu0 %v637
      %v701 = vpop.f32.mrf.mxu0
      %v702 = vadd.f32 %v594, %v701
      %703 = vmatmul.f32.gmra.mxu0 %v640
      %v704 = vpop.f32.mrf.mxu0
      %v705 = vadd.f32 %v594, %v704
      %706 = vmatmul.f32.gmra.mxu0 %v643
      %v707 = vpop.f32.mrf.mxu0
      %v708 = vadd.f32 %v594, %v707
      %709 = vmatmul.f32.gmra.mxu0 %v646
      %v710 = vpop.f32.mrf.mxu0
      %v711 = vadd.f32 %v594, %v710
      %712 = vdwg.mxu0
      %713 = vmatpush.msra.mxu0 0.0
      %714 = vmatpush.msra.mxu0 0.0
      %715 = vmatpush.msra.mxu0 0.0
      %716 = vmatpush.msra.mxu0 0.0
      %717 = vmatpush.msra.mxu0 0.0
      %718 = vmatpush.msra.mxu0 0.0
      %719 = vmatpush.msra.mxu0 0.0
      %720 = vmatpush.msra.mxu0 0.0
      %721 = vmatpush.msra.mxu0 0.0
      %722 = vmatpush.msra.mxu0 0.0
      %723 = vmatpush.msra.mxu0 0.0
      %724 = vmatpush.msra.mxu0 0.0
      %725 = vmatpush.msra.mxu0 %v590
      %726 = vmatpush.msra.mxu0 %v587
      %727 = vmatpush.msra.mxu0 %v584
      %728 = vmatpush.msra.mxu0 %v581
      %729 = vmatmul.f32.gmra.mxu0 %v601
      %v730 = vpop.f32.mrf.mxu0
      %v731 = vadd.f32 %v595, %v730
      %732 = vmatmul.f32.gmra.mxu0 %v604
      %v733 = vpop.f32.mrf.mxu0
      %v734 = vadd.f32 %v595, %v733
      %735 = vmatmul.f32.gmra.mxu0 %v607
      %v736 = vpop.f32.mrf.mxu0
      %v737 = vadd.f32 %v595, %v736
      %738 = vmatmul.f32.gmra.mxu0 %v610
      %v739 = vpop.f32.mrf.mxu0
      %v740 = vadd.f32 %v595, %v739
      %741 = vmatmul.f32.gmra.mxu0 %v613
      %v742 = vpop.f32.mrf.mxu0
      %v743 = vadd.f32 %v595, %v742
      %744 = vmatmul.f32.gmra.mxu0 %v616
      %v745 = vpop.f32.mrf.mxu0
      %v746 = vadd.f32 %v595, %v745
      %747 = vmatmul.f32.gmra.mxu0 %v619
      %v748 = vpop.f32.mrf.mxu0
      %v749 = vadd.f32 %v595, %v748
      %750 = vmatmul.f32.gmra.mxu0 %v622
      %v751 = vpop.f32.mrf.mxu0
      %v752 = vadd.f32 %v595, %v751
      %753 = vmatmul.f32.gmra.mxu0 %v625
      %v754 = vpop.f32.mrf.mxu0
      %v755 = vadd.f32 %v595, %v754
      %756 = vmatmul.f32.gmra.mxu0 %v628
      %v757 = vpop.f32.mrf.mxu0
      %v758 = vadd.f32 %v595, %v757
      %759 = vmatmul.f32.gmra.mxu0 %v631
      %v760 = vpop.f32.mrf.mxu0
      %v761 = vadd.f32 %v595, %v760
      %762 = vmatmul.f32.gmra.mxu0 %v634
      %v763 = vpop.f32.mrf.mxu0
      %v764 = vadd.f32 %v595, %v763
      %765 = vmatmul.f32.gmra.mxu0 %v637
      %v766 = vpop.f32.mrf.mxu0
      %v767 = vadd.f32 %v595, %v766
      %768 = vmatmul.f32.gmra.mxu0 %v640
      %v769 = vpop.f32.mrf.mxu0
      %v770 = vadd.f32 %v595, %v769
      %771 = vmatmul.f32.gmra.mxu0 %v643
      %v772 = vpop.f32.mrf.mxu0
      %v773 = vadd.f32 %v595, %v772
      %774 = vmatmul.f32.gmra.mxu0 %v646
      %v775 = vpop.f32.mrf.mxu0
      %v776 = vadd.f32 %v595, %v775
      %777 = vdwg.mxu0
      %778 = vmatpush.msra.mxu0 0.0
      %779 = vmatpush.msra.mxu0 0.0
      %780 = vmatpush.msra.mxu0 0.0
      %781 = vmatpush.msra.mxu0 0.0
      %782 = vmatpush.msra.mxu0 0.0
      %783 = vmatpush.msra.mxu0 0.0
      %784 = vmatpush.msra.mxu0 0.0
      %785 = vmatpush.msra.mxu0 0.0
      %786 = vmatpush.msra.mxu0 0.0
      %787 = vmatpush.msra.mxu0 0.0
      %788 = vmatpush.msra.mxu0 0.0
      %789 = vmatpush.msra.mxu0 0.0
      %790 = vmatpush.msra.mxu0 %v591
      %791 = vmatpush.msra.mxu0 %v588
      %792 = vmatpush.msra.mxu0 %v585
      %793 = vmatpush.msra.mxu0 %v582
      %794 = vmatmul.f32.gmra.mxu0 %v601
      %v795 = vpop.f32.mrf.mxu0
      %v796 = vadd.f32 %v596, %v795
      %797 = vmatmul.f32.gmra.mxu0 %v604
      %v798 = vpop.f32.mrf.mxu0
      %v799 = vadd.f32 %v596, %v798
      %800 = vmatmul.f32.gmra.mxu0 %v607
      %v801 = vpop.f32.mrf.mxu0
      %v802 = vadd.f32 %v596, %v801
      %803 = vmatmul.f32.gmra.mxu0 %v610
      %v804 = vpop.f32.mrf.mxu0
      %v805 = vadd.f32 %v596, %v804
      %806 = vmatmul.f32.gmra.mxu0 %v613
      %v807 = vpop.f32.mrf.mxu0
      %v808 = vadd.f32 %v596, %v807
      %809 = vmatmul.f32.gmra.mxu0 %v616
      %v810 = vpop.f32.mrf.mxu0
      %v811 = vadd.f32 %v596, %v810
      %812 = vmatmul.f32.gmra.mxu0 %v619
      %v813 = vpop.f32.mrf.mxu0
      %v814 = vadd.f32 %v596, %v813
      %815 = vmatmul.f32.gmra.mxu0 %v622
      %v816 = vpop.f32.mrf.mxu0
      %v817 = vadd.f32 %v596, %v816
      %818 = vmatmul.f32.gmra.mxu0 %v625
      %v819 = vpop.f32.mrf.mxu0
      %v820 = vadd.f32 %v596, %v819
      %821 = vmatmul.f32.gmra.mxu0 %v628
      %v822 = vpop.f32.mrf.mxu0
      %v823 = vadd.f32 %v596, %v822
      %824 = vmatmul.f32.gmra.mxu0 %v631
      %v825 = vpop.f32.mrf.mxu0
      %v826 = vadd.f32 %v596, %v825
      %827 = vmatmul.f32.gmra.mxu0 %v634
      %v828 = vpop.f32.mrf.mxu0
      %v829 = vadd.f32 %v596, %v828
      %830 = vmatmul.f32.gmra.mxu0 %v637
      %v831 = vpop.f32.mrf.mxu0
      %v832 = vadd.f32 %v596, %v831
      %833 = vmatmul.f32.gmra.mxu0 %v640
      %v834 = vpop.f32.mrf.mxu0
      %v835 = vadd.f32 %v596, %v834
      %836 = vmatmul.f32.gmra.mxu0 %v643
      %v837 = vpop.f32.mrf.mxu0
      %v838 = vadd.f32 %v596, %v837
      %839 = vmatmul.f32.gmra.mxu0 %v646
      %v840 = vpop.f32.mrf.mxu0
      %v841 = vadd.f32 %v596, %v840
      %842 = vdwg.mxu0
      %v843 = vxor.u32 %v666, 2147483648
      %v844 = vxor.u32 %v731, 2147483648
      %v845 = vxor.u32 %v796, 2147483648
      %v846 = vxor.u32 %v669, 2147483648
      %v847 = vxor.u32 %v734, 2147483648
      %v848 = vxor.u32 %v799, 2147483648
      %v849 = vxor.u32 %v672, 2147483648
      %v850 = vxor.u32 %v737, 2147483648
      %v851 = vxor.u32 %v802, 2147483648
      %v852 = vxor.u32 %v675, 2147483648
      %v853 = vxor.u32 %v740, 2147483648
      %v854 = vxor.u32 %v805, 2147483648
      %v855 = vxor.u32 %v678, 2147483648
      %v856 = vxor.u32 %v743, 2147483648
      %v857 = vxor.u32 %v808, 2147483648
      %v858 = vxor.u32 %v681, 2147483648
      %v859 = vxor.u32 %v746, 2147483648
      %v860 = vxor.u32 %v811, 2147483648
      %v861 = vxor.u32 %v684, 2147483648
      %v862 = vxor.u32 %v749, 2147483648
      %v863 = vxor.u32 %v814, 2147483648
      %v864 = vxor.u32 %v687, 2147483648
      %v865 = vxor.u32 %v752, 2147483648
      %v866 = vxor.u32 %v817, 2147483648
      %v867 = vxor.u32 %v690, 2147483648
      %v868 = vxor.u32 %v755, 2147483648
      %v869 = vxor.u32 %v820, 2147483648
      %v870 = vxor.u32 %v693, 2147483648
      %v871 = vxor.u32 %v758, 2147483648
      %v872 = vxor.u32 %v823, 2147483648
      %v873 = vxor.u32 %v696, 2147483648
      %v874 = vxor.u32 %v761, 2147483648
      %v875 = vxor.u32 %v826, 2147483648
      %v876 = vxor.u32 %v699, 2147483648
      %v877 = vxor.u32 %v764, 2147483648
      %v878 = vxor.u32 %v829, 2147483648
      %v879 = vxor.u32 %v702, 2147483648
      %v880 = vxor.u32 %v767, 2147483648
      %v881 = vxor.u32 %v832, 2147483648
      %v882 = vxor.u32 %v705, 2147483648
      %v883 = vxor.u32 %v770, 2147483648
      %v884 = vxor.u32 %v835, 2147483648
      %v885 = vxor.u32 %v708, 2147483648
      %v886 = vxor.u32 %v773, 2147483648
      %v887 = vxor.u32 %v838, 2147483648
      %v888 = vxor.u32 %v711, 2147483648
      %v889 = vxor.u32 %v776, 2147483648
      %v890 = vxor.u32 %v841, 2147483648
      %v891 = vmul.f32 %v843, 1.442695
      %v892 = vpow.pop %v891
      %v893 = vmul.f32 %v844, 1.442695
      %v894 = vpow.pop %v893
      %v895 = vmul.f32 %v845, 1.442695
      %v896 = vpow.pop %v895
      %v897 = vmul.f32 %v846, 1.442695
      %v898 = vpow.pop %v897
      %v899 = vmul.f32 %v847, 1.442695
      %v900 = vpow.pop %v899
      %v901 = vmul.f32 %v848, 1.442695
      %v902 = vpow.pop %v901
      %v903 = vmul.f32 %v849, 1.442695
      %v904 = vpow.pop %v903
      %v905 = vmul.f32 %v850, 1.442695
      %v906 = vpow.pop %v905
      %v907 = vmul.f32 %v851, 1.442695
      %v908 = vpow.pop %v907
      %v909 = vmul.f32 %v852, 1.442695
      %v910 = vpow.pop %v909
      %v911 = vmul.f32 %v853, 1.442695
      %v912 = vpow.pop %v911
      %v913 = vmul.f32 %v854, 1.442695
      %v914 = vpow.pop %v913
      %v915 = vmul.f32 %v855, 1.442695
      %v916 = vpow.pop %v915
      %v917 = vmul.f32 %v856, 1.442695
      %v918 = vpow.pop %v917
      %v919 = vmul.f32 %v857, 1.442695
      %v920 = vpow.pop %v919
      %v921 = vmul.f32 %v858, 1.442695
      %v922 = vpow.pop %v921
      %v923 = vmul.f32 %v859, 1.442695
      %v924 = vpow.pop %v923
      %v925 = vmul.f32 %v860, 1.442695
      %v926 = vpow.pop %v925
      %v927 = vmul.f32 %v861, 1.442695
      %v928 = vpow.pop %v927
      %v929 = vmul.f32 %v862, 1.442695
      %v930 = vpow.pop %v929
      %v931 = vmul.f32 %v863, 1.442695
      %v932 = vpow.pop %v931
      %v933 = vmul.f32 %v864, 1.442695
      %v934 = vpow.pop %v933
      %v935 = vmul.f32 %v865, 1.442695
      %v936 = vpow.pop %v935
      %v937 = vmul.f32 %v866, 1.442695
      %v938 = vpow.pop %v937
      %v939 = vmul.f32 %v867, 1.442695
      %v940 = vpow.pop %v939
      %v941 = vmul.f32 %v868, 1.442695
      %v942 = vpow.pop %v941
      %v943 = vmul.f32 %v869, 1.442695
      %v944 = vpow.pop %v943
      %v945 = vmul.f32 %v870, 1.442695
      %v946 = vpow.pop %v945
      %v947 = vmul.f32 %v871, 1.442695
      %v948 = vpow.pop %v947
      %v949 = vmul.f32 %v872, 1.442695
      %v950 = vpow.pop %v949
      %v951 = vmul.f32 %v873, 1.442695
      %v952 = vpow.pop %v951
      %v953 = vmul.f32 %v874, 1.442695
      %v954 = vpow.pop %v953
      %v955 = vmul.f32 %v875, 1.442695
      %v956 = vpow.pop %v955
      %v957 = vmul.f32 %v876, 1.442695
      %v958 = vpow.pop %v957
      %v959 = vmul.f32 %v877, 1.442695
      %v960 = vpow.pop %v959
      %v961 = vmul.f32 %v878, 1.442695
      %v962 = vpow.pop %v961
      %v963 = vmul.f32 %v879, 1.442695
      %v964 = vpow.pop %v963
      %v965 = vmul.f32 %v880, 1.442695
      %v966 = vpow.pop %v965
      %v967 = vmul.f32 %v881, 1.442695
      %v968 = vpow.pop %v967
      %v969 = vmul.f32 %v882, 1.442695
      %v970 = vpow.pop %v969
      %v971 = vmul.f32 %v883, 1.442695
      %v972 = vpow.pop %v971
      %v973 = vmul.f32 %v884, 1.442695
      %v974 = vpow.pop %v973
      %v975 = vmul.f32 %v885, 1.442695
      %v976 = vpow.pop %v975
      %v977 = vmul.f32 %v886, 1.442695
      %v978 = vpow.pop %v977
      %v979 = vmul.f32 %v887, 1.442695
      %v980 = vpow.pop %v979
      %v981 = vmul.f32 %v888, 1.442695
      %v982 = vpow.pop %v981
      %v983 = vmul.f32 %v889, 1.442695
      %v984 = vpow.pop %v983
      %v985 = vmul.f32 %v890, 1.442695
      %v986 = vpow.pop %v985
      %v987 = vadd.f32 %v892, 1.0
      %v988 = vadd.f32 %v894, 1.0
      %v989 = vadd.f32 %v896, 1.0
      %v990 = vadd.f32 %v898, 1.0
      %v991 = vadd.f32 %v900, 1.0
      %v992 = vadd.f32 %v902, 1.0
      %v993 = vadd.f32 %v904, 1.0
      %v994 = vadd.f32 %v906, 1.0
      %v995 = vadd.f32 %v908, 1.0
      %v996 = vadd.f32 %v910, 1.0
      %v997 = vadd.f32 %v912, 1.0
      %v998 = vadd.f32 %v914, 1.0
      %v999 = vadd.f32 %v916, 1.0
      %v1000 = vadd.f32 %v918, 1.0
      %v1001 = vadd.f32 %v920, 1.0
      %v1002 = vadd.f32 %v922, 1.0
      %v1003 = vadd.f32 %v924, 1.0
      %v1004 = vadd.f32 %v926, 1.0
      %v1005 = vadd.f32 %v928, 1.0
      %v1006 = vadd.f32 %v930, 1.0
      %v1007 = vadd.f32 %v932, 1.0
      %v1008 = vadd.f32 %v934, 1.0
      %v1009 = vadd.f32 %v936, 1.0
      %v1010 = vadd.f32 %v938, 1.0
      %v1011 = vadd.f32 %v940, 1.0
      %v1012 = vadd.f32 %v942, 1.0
      %v1013 = vadd.f32 %v944, 1.0
      %v1014 = vadd.f32 %v946, 1.0
      %v1015 = vadd.f32 %v948, 1.0
      %v1016 = vadd.f32 %v950, 1.0
      %v1017 = vadd.f32 %v952, 1.0
      %v1018 = vadd.f32 %v954, 1.0
      %v1019 = vadd.f32 %v956, 1.0
      %v1020 = vadd.f32 %v958, 1.0
      %v1021 = vadd.f32 %v960, 1.0
      %v1022 = vadd.f32 %v962, 1.0
      %v1023 = vadd.f32 %v964, 1.0
      %v1024 = vadd.f32 %v966, 1.0
      %v1025 = vadd.f32 %v968, 1.0
      %v1026 = vadd.f32 %v970, 1.0
      %v1027 = vadd.f32 %v972, 1.0
      %v1028 = vadd.f32 %v974, 1.0
      %v1029 = vadd.f32 %v976, 1.0
      %v1030 = vadd.f32 %v978, 1.0
      %v1031 = vadd.f32 %v980, 1.0
      %v1032 = vadd.f32 %v982, 1.0
      %v1033 = vadd.f32 %v984, 1.0
      %v1034 = vadd.f32 %v986, 1.0
      %v1035 = vrcp.pop %v987
      %v1036 = vmul.f32 %v987, %v1035
      %v1037 = vsub.f32 1.0, %v1036
      %v1038 = vmul.f32 %v1035, %v1037
      %v1039 = vadd.f32 %v1035, %v1038
      %vm1040 = vweird.f32 %v987
      %vm1041 = vweird.f32 %v1035
      %vm1042 = vmor %vm1040, %vm1041
      %v1043 = vsel %vm1042, %v1035, %v1039
      %v1044 = vand.u32 2147483647, %v987
      %vm1045 = vcmp.eq.f32.partialorder %v1044, 8.507059e+37
      %v1046 = vand.u32 %v987, 2147483648
      %v1047 = vor.u32 1.1754944e-38, %v1046
      %v1048 = vsel %vm1045, %v1047, %v1043
      %v1049 = vmul.f32 1.0, %v1048
      %v1050 = vrcp.pop %v988
      %v1051 = vmul.f32 %v988, %v1050
      %v1052 = vsub.f32 1.0, %v1051
      %v1053 = vmul.f32 %v1050, %v1052
      %v1054 = vadd.f32 %v1050, %v1053
      %vm1055 = vweird.f32 %v988
      %vm1056 = vweird.f32 %v1050
      %vm1057 = vmor %vm1055, %vm1056
      %v1058 = vsel %vm1057, %v1050, %v1054
      %v1059 = vand.u32 2147483647, %v988
      %vm1060 = vcmp.eq.f32.partialorder %v1059, 8.507059e+37
      %v1061 = vand.u32 %v988, 2147483648
      %v1062 = vor.u32 1.1754944e-38, %v1061
      %v1063 = vsel %vm1060, %v1062, %v1058
      %v1064 = vmul.f32 1.0, %v1063
      %v1065 = vrcp.pop %v989
      %v1066 = vmul.f32 %v989, %v1065
      %v1067 = vsub.f32 1.0, %v1066
      %v1068 = vmul.f32 %v1065, %v1067
      %v1069 = vadd.f32 %v1065, %v1068
      %vm1070 = vweird.f32 %v989
      %vm1071 = vweird.f32 %v1065
      %vm1072 = vmor %vm1070, %vm1071
      %v1073 = vsel %vm1072, %v1065, %v1069
      %v1074 = vand.u32 2147483647, %v989
      %vm1075 = vcmp.eq.f32.partialorder %v1074, 8.507059e+37
      %v1076 = vand.u32 %v989, 2147483648
      %v1077 = vor.u32 1.1754944e-38, %v1076
      %v1078 = vsel %vm1075, %v1077, %v1073
      %v1079 = vmul.f32 1.0, %v1078
      %v1080 = vrcp.pop %v990
      %v1081 = vmul.f32 %v990, %v1080
      %v1082 = vsub.f32 1.0, %v1081
      %v1083 = vmul.f32 %v1080, %v1082
      %v1084 = vadd.f32 %v1080, %v1083
      %vm1085 = vweird.f32 %v990
      %vm1086 = vweird.f32 %v1080
      %vm1087 = vmor %vm1085, %vm1086
      %v1088 = vsel %vm1087, %v1080, %v1084
      %v1089 = vand.u32 2147483647, %v990
      %vm1090 = vcmp.eq.f32.partialorder %v1089, 8.507059e+37
      %v1091 = vand.u32 %v990, 2147483648
      %v1092 = vor.u32 1.1754944e-38, %v1091
      %v1093 = vsel %vm1090, %v1092, %v1088
      %v1094 = vmul.f32 1.0, %v1093
      %v1095 = vrcp.pop %v991
      %v1096 = vmul.f32 %v991, %v1095
      %v1097 = vsub.f32 1.0, %v1096
      %v1098 = vmul.f32 %v1095, %v1097
      %v1099 = vadd.f32 %v1095, %v1098
      %vm1100 = vweird.f32 %v991
      %vm1101 = vweird.f32 %v1095
      %vm1102 = vmor %vm1100, %vm1101
      %v1103 = vsel %vm1102, %v1095, %v1099
      %v1104 = vand.u32 2147483647, %v991
      %vm1105 = vcmp.eq.f32.partialorder %v1104, 8.507059e+37
      %v1106 = vand.u32 %v991, 2147483648
      %v1107 = vor.u32 1.1754944e-38, %v1106
      %v1108 = vsel %vm1105, %v1107, %v1103
      %v1109 = vmul.f32 1.0, %v1108
      %v1110 = vrcp.pop %v992
      %v1111 = vmul.f32 %v992, %v1110
      %v1112 = vsub.f32 1.0, %v1111
      %v1113 = vmul.f32 %v1110, %v1112
      %v1114 = vadd.f32 %v1110, %v1113
      %vm1115 = vweird.f32 %v992
      %vm1116 = vweird.f32 %v1110
      %vm1117 = vmor %vm1115, %vm1116
      %v1118 = vsel %vm1117, %v1110, %v1114
      %v1119 = vand.u32 2147483647, %v992
      %vm1120 = vcmp.eq.f32.partialorder %v1119, 8.507059e+37
      %v1121 = vand.u32 %v992, 2147483648
      %v1122 = vor.u32 1.1754944e-38, %v1121
      %v1123 = vsel %vm1120, %v1122, %v1118
      %v1124 = vmul.f32 1.0, %v1123
      %v1125 = vrcp.pop %v993
      %v1126 = vmul.f32 %v993, %v1125
      %v1127 = vsub.f32 1.0, %v1126
      %v1128 = vmul.f32 %v1125, %v1127
      %v1129 = vadd.f32 %v1125, %v1128
      %vm1130 = vweird.f32 %v993
      %vm1131 = vweird.f32 %v1125
      %vm1132 = vmor %vm1130, %vm1131
      %v1133 = vsel %vm1132, %v1125, %v1129
      %v1134 = vand.u32 2147483647, %v993
      %vm1135 = vcmp.eq.f32.partialorder %v1134, 8.507059e+37
      %v1136 = vand.u32 %v993, 2147483648
      %v1137 = vor.u32 1.1754944e-38, %v1136
      %v1138 = vsel %vm1135, %v1137, %v1133
      %v1139 = vmul.f32 1.0, %v1138
      %v1140 = vrcp.pop %v994
      %v1141 = vmul.f32 %v994, %v1140
      %v1142 = vsub.f32 1.0, %v1141
      %v1143 = vmul.f32 %v1140, %v1142
      %v1144 = vadd.f32 %v1140, %v1143
      %vm1145 = vweird.f32 %v994
      %vm1146 = vweird.f32 %v1140
      %vm1147 = vmor %vm1145, %vm1146
      %v1148 = vsel %vm1147, %v1140, %v1144
      %v1149 = vand.u32 2147483647, %v994
      %vm1150 = vcmp.eq.f32.partialorder %v1149, 8.507059e+37
      %v1151 = vand.u32 %v994, 2147483648
      %v1152 = vor.u32 1.1754944e-38, %v1151
      %v1153 = vsel %vm1150, %v1152, %v1148
      %v1154 = vmul.f32 1.0, %v1153
      %v1155 = vrcp.pop %v995
      %v1156 = vmul.f32 %v995, %v1155
      %v1157 = vsub.f32 1.0, %v1156
      %v1158 = vmul.f32 %v1155, %v1157
      %v1159 = vadd.f32 %v1155, %v1158
      %vm1160 = vweird.f32 %v995
      %vm1161 = vweird.f32 %v1155
      %vm1162 = vmor %vm1160, %vm1161
      %v1163 = vsel %vm1162, %v1155, %v1159
      %v1164 = vand.u32 2147483647, %v995
      %vm1165 = vcmp.eq.f32.partialorder %v1164, 8.507059e+37
      %v1166 = vand.u32 %v995, 2147483648
      %v1167 = vor.u32 1.1754944e-38, %v1166
      %v1168 = vsel %vm1165, %v1167, %v1163
      %v1169 = vmul.f32 1.0, %v1168
      %v1170 = vrcp.pop %v996
      %v1171 = vmul.f32 %v996, %v1170
      %v1172 = vsub.f32 1.0, %v1171
      %v1173 = vmul.f32 %v1170, %v1172
      %v1174 = vadd.f32 %v1170, %v1173
      %vm1175 = vweird.f32 %v996
      %vm1176 = vweird.f32 %v1170
      %vm1177 = vmor %vm1175, %vm1176
      %v1178 = vsel %vm1177, %v1170, %v1174
      %v1179 = vand.u32 2147483647, %v996
      %vm1180 = vcmp.eq.f32.partialorder %v1179, 8.507059e+37
      %v1181 = vand.u32 %v996, 2147483648
      %v1182 = vor.u32 1.1754944e-38, %v1181
      %v1183 = vsel %vm1180, %v1182, %v1178
      %v1184 = vmul.f32 1.0, %v1183
      %v1185 = vrcp.pop %v997
      %v1186 = vmul.f32 %v997, %v1185
      %v1187 = vsub.f32 1.0, %v1186
      %v1188 = vmul.f32 %v1185, %v1187
      %v1189 = vadd.f32 %v1185, %v1188
      %vm1190 = vweird.f32 %v997
      %vm1191 = vweird.f32 %v1185
      %vm1192 = vmor %vm1190, %vm1191
      %v1193 = vsel %vm1192, %v1185, %v1189
      %v1194 = vand.u32 2147483647, %v997
      %vm1195 = vcmp.eq.f32.partialorder %v1194, 8.507059e+37
      %v1196 = vand.u32 %v997, 2147483648
      %v1197 = vor.u32 1.1754944e-38, %v1196
      %v1198 = vsel %vm1195, %v1197, %v1193
      %v1199 = vmul.f32 1.0, %v1198
      %v1200 = vrcp.pop %v998
      %v1201 = vmul.f32 %v998, %v1200
      %v1202 = vsub.f32 1.0, %v1201
      %v1203 = vmul.f32 %v1200, %v1202
      %v1204 = vadd.f32 %v1200, %v1203
      %vm1205 = vweird.f32 %v998
      %vm1206 = vweird.f32 %v1200
      %vm1207 = vmor %vm1205, %vm1206
      %v1208 = vsel %vm1207, %v1200, %v1204
      %v1209 = vand.u32 2147483647, %v998
      %vm1210 = vcmp.eq.f32.partialorder %v1209, 8.507059e+37
      %v1211 = vand.u32 %v998, 2147483648
      %v1212 = vor.u32 1.1754944e-38, %v1211
      %v1213 = vsel %vm1210, %v1212, %v1208
      %v1214 = vmul.f32 1.0, %v1213
      %v1215 = vrcp.pop %v999
      %v1216 = vmul.f32 %v999, %v1215
      %v1217 = vsub.f32 1.0, %v1216
      %v1218 = vmul.f32 %v1215, %v1217
      %v1219 = vadd.f32 %v1215, %v1218
      %vm1220 = vweird.f32 %v999
      %vm1221 = vweird.f32 %v1215
      %vm1222 = vmor %vm1220, %vm1221
      %v1223 = vsel %vm1222, %v1215, %v1219
      %v1224 = vand.u32 2147483647, %v999
      %vm1225 = vcmp.eq.f32.partialorder %v1224, 8.507059e+37
      %v1226 = vand.u32 %v999, 2147483648
      %v1227 = vor.u32 1.1754944e-38, %v1226
      %v1228 = vsel %vm1225, %v1227, %v1223
      %v1229 = vmul.f32 1.0, %v1228
      %v1230 = vrcp.pop %v1000
      %v1231 = vmul.f32 %v1000, %v1230
      %v1232 = vsub.f32 1.0, %v1231
      %v1233 = vmul.f32 %v1230, %v1232
      %v1234 = vadd.f32 %v1230, %v1233
      %vm1235 = vweird.f32 %v1000
      %vm1236 = vweird.f32 %v1230
      %vm1237 = vmor %vm1235, %vm1236
      %v1238 = vsel %vm1237, %v1230, %v1234
      %v1239 = vand.u32 2147483647, %v1000
      %vm1240 = vcmp.eq.f32.partialorder %v1239, 8.507059e+37
      %v1241 = vand.u32 %v1000, 2147483648
      %v1242 = vor.u32 1.1754944e-38, %v1241
      %v1243 = vsel %vm1240, %v1242, %v1238
      %v1244 = vmul.f32 1.0, %v1243
      %v1245 = vrcp.pop %v1001
      %v1246 = vmul.f32 %v1001, %v1245
      %v1247 = vsub.f32 1.0, %v1246
      %v1248 = vmul.f32 %v1245, %v1247
      %v1249 = vadd.f32 %v1245, %v1248
      %vm1250 = vweird.f32 %v1001
      %vm1251 = vweird.f32 %v1245
      %vm1252 = vmor %vm1250, %vm1251
      %v1253 = vsel %vm1252, %v1245, %v1249
      %v1254 = vand.u32 2147483647, %v1001
      %vm1255 = vcmp.eq.f32.partialorder %v1254, 8.507059e+37
      %v1256 = vand.u32 %v1001, 2147483648
      %v1257 = vor.u32 1.1754944e-38, %v1256
      %v1258 = vsel %vm1255, %v1257, %v1253
      %v1259 = vmul.f32 1.0, %v1258
      %v1260 = vrcp.pop %v1002
      %v1261 = vmul.f32 %v1002, %v1260
      %v1262 = vsub.f32 1.0, %v1261
      %v1263 = vmul.f32 %v1260, %v1262
      %v1264 = vadd.f32 %v1260, %v1263
      %vm1265 = vweird.f32 %v1002
      %vm1266 = vweird.f32 %v1260
      %vm1267 = vmor %vm1265, %vm1266
      %v1268 = vsel %vm1267, %v1260, %v1264
      %v1269 = vand.u32 2147483647, %v1002
      %vm1270 = vcmp.eq.f32.partialorder %v1269, 8.507059e+37
      %v1271 = vand.u32 %v1002, 2147483648
      %v1272 = vor.u32 1.1754944e-38, %v1271
      %v1273 = vsel %vm1270, %v1272, %v1268
      %v1274 = vmul.f32 1.0, %v1273
      %v1275 = vrcp.pop %v1003
      %v1276 = vmul.f32 %v1003, %v1275
      %v1277 = vsub.f32 1.0, %v1276
      %v1278 = vmul.f32 %v1275, %v1277
      %v1279 = vadd.f32 %v1275, %v1278
      %vm1280 = vweird.f32 %v1003
      %vm1281 = vweird.f32 %v1275
      %vm1282 = vmor %vm1280, %vm1281
      %v1283 = vsel %vm1282, %v1275, %v1279
      %v1284 = vand.u32 2147483647, %v1003
      %vm1285 = vcmp.eq.f32.partialorder %v1284, 8.507059e+37
      %v1286 = vand.u32 %v1003, 2147483648
      %v1287 = vor.u32 1.1754944e-38, %v1286
      %v1288 = vsel %vm1285, %v1287, %v1283
      %v1289 = vmul.f32 1.0, %v1288
      %v1290 = vrcp.pop %v1004
      %v1291 = vmul.f32 %v1004, %v1290
      %v1292 = vsub.f32 1.0, %v1291
      %v1293 = vmul.f32 %v1290, %v1292
      %v1294 = vadd.f32 %v1290, %v1293
      %vm1295 = vweird.f32 %v1004
      %vm1296 = vweird.f32 %v1290
      %vm1297 = vmor %vm1295, %vm1296
      %v1298 = vsel %vm1297, %v1290, %v1294
      %v1299 = vand.u32 2147483647, %v1004
      %vm1300 = vcmp.eq.f32.partialorder %v1299, 8.507059e+37
      %v1301 = vand.u32 %v1004, 2147483648
      %v1302 = vor.u32 1.1754944e-38, %v1301
      %v1303 = vsel %vm1300, %v1302, %v1298
      %v1304 = vmul.f32 1.0, %v1303
      %v1305 = vrcp.pop %v1005
      %v1306 = vmul.f32 %v1005, %v1305
      %v1307 = vsub.f32 1.0, %v1306
      %v1308 = vmul.f32 %v1305, %v1307
      %v1309 = vadd.f32 %v1305, %v1308
      %vm1310 = vweird.f32 %v1005
      %vm1311 = vweird.f32 %v1305
      %vm1312 = vmor %vm1310, %vm1311
      %v1313 = vsel %vm1312, %v1305, %v1309
      %v1314 = vand.u32 2147483647, %v1005
      %vm1315 = vcmp.eq.f32.partialorder %v1314, 8.507059e+37
      %v1316 = vand.u32 %v1005, 2147483648
      %v1317 = vor.u32 1.1754944e-38, %v1316
      %v1318 = vsel %vm1315, %v1317, %v1313
      %v1319 = vmul.f32 1.0, %v1318
      %v1320 = vrcp.pop %v1006
      %v1321 = vmul.f32 %v1006, %v1320
      %v1322 = vsub.f32 1.0, %v1321
      %v1323 = vmul.f32 %v1320, %v1322
      %v1324 = vadd.f32 %v1320, %v1323
      %vm1325 = vweird.f32 %v1006
      %vm1326 = vweird.f32 %v1320
      %vm1327 = vmor %vm1325, %vm1326
      %v1328 = vsel %vm1327, %v1320, %v1324
      %v1329 = vand.u32 2147483647, %v1006
      %vm1330 = vcmp.eq.f32.partialorder %v1329, 8.507059e+37
      %v1331 = vand.u32 %v1006, 2147483648
      %v1332 = vor.u32 1.1754944e-38, %v1331
      %v1333 = vsel %vm1330, %v1332, %v1328
      %v1334 = vmul.f32 1.0, %v1333
      %v1335 = vrcp.pop %v1007
      %v1336 = vmul.f32 %v1007, %v1335
      %v1337 = vsub.f32 1.0, %v1336
      %v1338 = vmul.f32 %v1335, %v1337
      %v1339 = vadd.f32 %v1335, %v1338
      %vm1340 = vweird.f32 %v1007
      %vm1341 = vweird.f32 %v1335
      %vm1342 = vmor %vm1340, %vm1341
      %v1343 = vsel %vm1342, %v1335, %v1339
      %v1344 = vand.u32 2147483647, %v1007
      %vm1345 = vcmp.eq.f32.partialorder %v1344, 8.507059e+37
      %v1346 = vand.u32 %v1007, 2147483648
      %v1347 = vor.u32 1.1754944e-38, %v1346
      %v1348 = vsel %vm1345, %v1347, %v1343
      %v1349 = vmul.f32 1.0, %v1348
      %v1350 = vrcp.pop %v1008
      %v1351 = vmul.f32 %v1008, %v1350
      %v1352 = vsub.f32 1.0, %v1351
      %v1353 = vmul.f32 %v1350, %v1352
      %v1354 = vadd.f32 %v1350, %v1353
      %vm1355 = vweird.f32 %v1008
      %vm1356 = vweird.f32 %v1350
      %vm1357 = vmor %vm1355, %vm1356
      %v1358 = vsel %vm1357, %v1350, %v1354
      %v1359 = vand.u32 2147483647, %v1008
      %vm1360 = vcmp.eq.f32.partialorder %v1359, 8.507059e+37
      %v1361 = vand.u32 %v1008, 2147483648
      %v1362 = vor.u32 1.1754944e-38, %v1361
      %v1363 = vsel %vm1360, %v1362, %v1358
      %v1364 = vmul.f32 1.0, %v1363
      %v1365 = vrcp.pop %v1009
      %v1366 = vmul.f32 %v1009, %v1365
      %v1367 = vsub.f32 1.0, %v1366
      %v1368 = vmul.f32 %v1365, %v1367
      %v1369 = vadd.f32 %v1365, %v1368
      %vm1370 = vweird.f32 %v1009
      %vm1371 = vweird.f32 %v1365
      %vm1372 = vmor %vm1370, %vm1371
      %v1373 = vsel %vm1372, %v1365, %v1369
      %v1374 = vand.u32 2147483647, %v1009
      %vm1375 = vcmp.eq.f32.partialorder %v1374, 8.507059e+37
      %v1376 = vand.u32 %v1009, 2147483648
      %v1377 = vor.u32 1.1754944e-38, %v1376
      %v1378 = vsel %vm1375, %v1377, %v1373
      %v1379 = vmul.f32 1.0, %v1378
      %v1380 = vrcp.pop %v1010
      %v1381 = vmul.f32 %v1010, %v1380
      %v1382 = vsub.f32 1.0, %v1381
      %v1383 = vmul.f32 %v1380, %v1382
      %v1384 = vadd.f32 %v1380, %v1383
      %vm1385 = vweird.f32 %v1010
      %vm1386 = vweird.f32 %v1380
      %vm1387 = vmor %vm1385, %vm1386
      %v1388 = vsel %vm1387, %v1380, %v1384
      %v1389 = vand.u32 2147483647, %v1010
      %vm1390 = vcmp.eq.f32.partialorder %v1389, 8.507059e+37
      %v1391 = vand.u32 %v1010, 2147483648
      %v1392 = vor.u32 1.1754944e-38, %v1391
      %v1393 = vsel %vm1390, %v1392, %v1388
      %v1394 = vmul.f32 1.0, %v1393
      %v1395 = vrcp.pop %v1011
      %v1396 = vmul.f32 %v1011, %v1395
      %v1397 = vsub.f32 1.0, %v1396
      %v1398 = vmul.f32 %v1395, %v1397
      %v1399 = vadd.f32 %v1395, %v1398
      %vm1400 = vweird.f32 %v1011
      %vm1401 = vweird.f32 %v1395
      %vm1402 = vmor %vm1400, %vm1401
      %v1403 = vsel %vm1402, %v1395, %v1399
      %v1404 = vand.u32 2147483647, %v1011
      %vm1405 = vcmp.eq.f32.partialorder %v1404, 8.507059e+37
      %v1406 = vand.u32 %v1011, 2147483648
      %v1407 = vor.u32 1.1754944e-38, %v1406
      %v1408 = vsel %vm1405, %v1407, %v1403
      %v1409 = vmul.f32 1.0, %v1408
      %v1410 = vrcp.pop %v1012
      %v1411 = vmul.f32 %v1012, %v1410
      %v1412 = vsub.f32 1.0, %v1411
      %v1413 = vmul.f32 %v1410, %v1412
      %v1414 = vadd.f32 %v1410, %v1413
      %vm1415 = vweird.f32 %v1012
      %vm1416 = vweird.f32 %v1410
      %vm1417 = vmor %vm1415, %vm1416
      %v1418 = vsel %vm1417, %v1410, %v1414
      %v1419 = vand.u32 2147483647, %v1012
      %vm1420 = vcmp.eq.f32.partialorder %v1419, 8.507059e+37
      %v1421 = vand.u32 %v1012, 2147483648
      %v1422 = vor.u32 1.1754944e-38, %v1421
      %v1423 = vsel %vm1420, %v1422, %v1418
      %v1424 = vmul.f32 1.0, %v1423
      %v1425 = vrcp.pop %v1013
      %v1426 = vmul.f32 %v1013, %v1425
      %v1427 = vsub.f32 1.0, %v1426
      %v1428 = vmul.f32 %v1425, %v1427
      %v1429 = vadd.f32 %v1425, %v1428
      %vm1430 = vweird.f32 %v1013
      %vm1431 = vweird.f32 %v1425
      %vm1432 = vmor %vm1430, %vm1431
      %v1433 = vsel %vm1432, %v1425, %v1429
      %v1434 = vand.u32 2147483647, %v1013
      %vm1435 = vcmp.eq.f32.partialorder %v1434, 8.507059e+37
      %v1436 = vand.u32 %v1013, 2147483648
      %v1437 = vor.u32 1.1754944e-38, %v1436
      %v1438 = vsel %vm1435, %v1437, %v1433
      %v1439 = vmul.f32 1.0, %v1438
      %v1440 = vrcp.pop %v1014
      %v1441 = vmul.f32 %v1014, %v1440
      %v1442 = vsub.f32 1.0, %v1441
      %v1443 = vmul.f32 %v1440, %v1442
      %v1444 = vadd.f32 %v1440, %v1443
      %vm1445 = vweird.f32 %v1014
      %vm1446 = vweird.f32 %v1440
      %vm1447 = vmor %vm1445, %vm1446
      %v1448 = vsel %vm1447, %v1440, %v1444
      %v1449 = vand.u32 2147483647, %v1014
      %vm1450 = vcmp.eq.f32.partialorder %v1449, 8.507059e+37
      %v1451 = vand.u32 %v1014, 2147483648
      %v1452 = vor.u32 1.1754944e-38, %v1451
      %v1453 = vsel %vm1450, %v1452, %v1448
      %v1454 = vmul.f32 1.0, %v1453
      %v1455 = vrcp.pop %v1015
      %v1456 = vmul.f32 %v1015, %v1455
      %v1457 = vsub.f32 1.0, %v1456
      %v1458 = vmul.f32 %v1455, %v1457
      %v1459 = vadd.f32 %v1455, %v1458
      %vm1460 = vweird.f32 %v1015
      %vm1461 = vweird.f32 %v1455
      %vm1462 = vmor %vm1460, %vm1461
      %v1463 = vsel %vm1462, %v1455, %v1459
      %v1464 = vand.u32 2147483647, %v1015
      %vm1465 = vcmp.eq.f32.partialorder %v1464, 8.507059e+37
      %v1466 = vand.u32 %v1015, 2147483648
      %v1467 = vor.u32 1.1754944e-38, %v1466
      %v1468 = vsel %vm1465, %v1467, %v1463
      %v1469 = vmul.f32 1.0, %v1468
      %v1470 = vrcp.pop %v1016
      %v1471 = vmul.f32 %v1016, %v1470
      %v1472 = vsub.f32 1.0, %v1471
      %v1473 = vmul.f32 %v1470, %v1472
      %v1474 = vadd.f32 %v1470, %v1473
      %vm1475 = vweird.f32 %v1016
      %vm1476 = vweird.f32 %v1470
      %vm1477 = vmor %vm1475, %vm1476
      %v1478 = vsel %vm1477, %v1470, %v1474
      %v1479 = vand.u32 2147483647, %v1016
      %vm1480 = vcmp.eq.f32.partialorder %v1479, 8.507059e+37
      %v1481 = vand.u32 %v1016, 2147483648
      %v1482 = vor.u32 1.1754944e-38, %v1481
      %v1483 = vsel %vm1480, %v1482, %v1478
      %v1484 = vmul.f32 1.0, %v1483
      %v1485 = vrcp.pop %v1017
      %v1486 = vmul.f32 %v1017, %v1485
      %v1487 = vsub.f32 1.0, %v1486
      %v1488 = vmul.f32 %v1485, %v1487
      %v1489 = vadd.f32 %v1485, %v1488
      %vm1490 = vweird.f32 %v1017
      %vm1491 = vweird.f32 %v1485
      %vm1492 = vmor %vm1490, %vm1491
      %v1493 = vsel %vm1492, %v1485, %v1489
      %v1494 = vand.u32 2147483647, %v1017
      %vm1495 = vcmp.eq.f32.partialorder %v1494, 8.507059e+37
      %v1496 = vand.u32 %v1017, 2147483648
      %v1497 = vor.u32 1.1754944e-38, %v1496
      %v1498 = vsel %vm1495, %v1497, %v1493
      %v1499 = vmul.f32 1.0, %v1498
      %v1500 = vrcp.pop %v1018
      %v1501 = vmul.f32 %v1018, %v1500
      %v1502 = vsub.f32 1.0, %v1501
      %v1503 = vmul.f32 %v1500, %v1502
      %v1504 = vadd.f32 %v1500, %v1503
      %vm1505 = vweird.f32 %v1018
      %vm1506 = vweird.f32 %v1500
      %vm1507 = vmor %vm1505, %vm1506
      %v1508 = vsel %vm1507, %v1500, %v1504
      %v1509 = vand.u32 2147483647, %v1018
      %vm1510 = vcmp.eq.f32.partialorder %v1509, 8.507059e+37
      %v1511 = vand.u32 %v1018, 2147483648
      %v1512 = vor.u32 1.1754944e-38, %v1511
      %v1513 = vsel %vm1510, %v1512, %v1508
      %v1514 = vmul.f32 1.0, %v1513
      %v1515 = vrcp.pop %v1019
      %v1516 = vmul.f32 %v1019, %v1515
      %v1517 = vsub.f32 1.0, %v1516
      %v1518 = vmul.f32 %v1515, %v1517
      %v1519 = vadd.f32 %v1515, %v1518
      %vm1520 = vweird.f32 %v1019
      %vm1521 = vweird.f32 %v1515
      %vm1522 = vmor %vm1520, %vm1521
      %v1523 = vsel %vm1522, %v1515, %v1519
      %v1524 = vand.u32 2147483647, %v1019
      %vm1525 = vcmp.eq.f32.partialorder %v1524, 8.507059e+37
      %v1526 = vand.u32 %v1019, 2147483648
      %v1527 = vor.u32 1.1754944e-38, %v1526
      %v1528 = vsel %vm1525, %v1527, %v1523
      %v1529 = vmul.f32 1.0, %v1528
      %v1530 = vrcp.pop %v1020
      %v1531 = vmul.f32 %v1020, %v1530
      %v1532 = vsub.f32 1.0, %v1531
      %v1533 = vmul.f32 %v1530, %v1532
      %v1534 = vadd.f32 %v1530, %v1533
      %vm1535 = vweird.f32 %v1020
      %vm1536 = vweird.f32 %v1530
      %vm1537 = vmor %vm1535, %vm1536
      %v1538 = vsel %vm1537, %v1530, %v1534
      %v1539 = vand.u32 2147483647, %v1020
      %vm1540 = vcmp.eq.f32.partialorder %v1539, 8.507059e+37
      %v1541 = vand.u32 %v1020, 2147483648
      %v1542 = vor.u32 1.1754944e-38, %v1541
      %v1543 = vsel %vm1540, %v1542, %v1538
      %v1544 = vmul.f32 1.0, %v1543
      %v1545 = vrcp.pop %v1021
      %v1546 = vmul.f32 %v1021, %v1545
      %v1547 = vsub.f32 1.0, %v1546
      %v1548 = vmul.f32 %v1545, %v1547
      %v1549 = vadd.f32 %v1545, %v1548
      %vm1550 = vweird.f32 %v1021
      %vm1551 = vweird.f32 %v1545
      %vm1552 = vmor %vm1550, %vm1551
      %v1553 = vsel %vm1552, %v1545, %v1549
      %v1554 = vand.u32 2147483647, %v1021
      %vm1555 = vcmp.eq.f32.partialorder %v1554, 8.507059e+37
      %v1556 = vand.u32 %v1021, 2147483648
      %v1557 = vor.u32 1.1754944e-38, %v1556
      %v1558 = vsel %vm1555, %v1557, %v1553
      %v1559 = vmul.f32 1.0, %v1558
      %v1560 = vrcp.pop %v1022
      %v1561 = vmul.f32 %v1022, %v1560
      %v1562 = vsub.f32 1.0, %v1561
      %v1563 = vmul.f32 %v1560, %v1562
      %v1564 = vadd.f32 %v1560, %v1563
      %vm1565 = vweird.f32 %v1022
      %vm1566 = vweird.f32 %v1560
      %vm1567 = vmor %vm1565, %vm1566
      %v1568 = vsel %vm1567, %v1560, %v1564
      %v1569 = vand.u32 2147483647, %v1022
      %vm1570 = vcmp.eq.f32.partialorder %v1569, 8.507059e+37
      %v1571 = vand.u32 %v1022, 2147483648
      %v1572 = vor.u32 1.1754944e-38, %v1571
      %v1573 = vsel %vm1570, %v1572, %v1568
      %v1574 = vmul.f32 1.0, %v1573
      %v1575 = vrcp.pop %v1023
      %v1576 = vmul.f32 %v1023, %v1575
      %v1577 = vsub.f32 1.0, %v1576
      %v1578 = vmul.f32 %v1575, %v1577
      %v1579 = vadd.f32 %v1575, %v1578
      %vm1580 = vweird.f32 %v1023
      %vm1581 = vweird.f32 %v1575
      %vm1582 = vmor %vm1580, %vm1581
      %v1583 = vsel %vm1582, %v1575, %v1579
      %v1584 = vand.u32 2147483647, %v1023
      %vm1585 = vcmp.eq.f32.partialorder %v1584, 8.507059e+37
      %v1586 = vand.u32 %v1023, 2147483648
      %v1587 = vor.u32 1.1754944e-38, %v1586
      %v1588 = vsel %vm1585, %v1587, %v1583
      %v1589 = vmul.f32 1.0, %v1588
      %v1590 = vrcp.pop %v1024
      %v1591 = vmul.f32 %v1024, %v1590
      %v1592 = vsub.f32 1.0, %v1591
      %v1593 = vmul.f32 %v1590, %v1592
      %v1594 = vadd.f32 %v1590, %v1593
      %vm1595 = vweird.f32 %v1024
      %vm1596 = vweird.f32 %v1590
      %vm1597 = vmor %vm1595, %vm1596
      %v1598 = vsel %vm1597, %v1590, %v1594
      %v1599 = vand.u32 2147483647, %v1024
      %vm1600 = vcmp.eq.f32.partialorder %v1599, 8.507059e+37
      %v1601 = vand.u32 %v1024, 2147483648
      %v1602 = vor.u32 1.1754944e-38, %v1601
      %v1603 = vsel %vm1600, %v1602, %v1598
      %v1604 = vmul.f32 1.0, %v1603
      %v1605 = vrcp.pop %v1025
      %v1606 = vmul.f32 %v1025, %v1605
      %v1607 = vsub.f32 1.0, %v1606
      %v1608 = vmul.f32 %v1605, %v1607
      %v1609 = vadd.f32 %v1605, %v1608
      %vm1610 = vweird.f32 %v1025
      %vm1611 = vweird.f32 %v1605
      %vm1612 = vmor %vm1610, %vm1611
      %v1613 = vsel %vm1612, %v1605, %v1609
      %v1614 = vand.u32 2147483647, %v1025
      %vm1615 = vcmp.eq.f32.partialorder %v1614, 8.507059e+37
      %v1616 = vand.u32 %v1025, 2147483648
      %v1617 = vor.u32 1.1754944e-38, %v1616
      %v1618 = vsel %vm1615, %v1617, %v1613
      %v1619 = vmul.f32 1.0, %v1618
      %v1620 = vrcp.pop %v1026
      %v1621 = vmul.f32 %v1026, %v1620
      %v1622 = vsub.f32 1.0, %v1621
      %v1623 = vmul.f32 %v1620, %v1622
      %v1624 = vadd.f32 %v1620, %v1623
      %vm1625 = vweird.f32 %v1026
      %vm1626 = vweird.f32 %v1620
      %vm1627 = vmor %vm1625, %vm1626
      %v1628 = vsel %vm1627, %v1620, %v1624
      %v1629 = vand.u32 2147483647, %v1026
      %vm1630 = vcmp.eq.f32.partialorder %v1629, 8.507059e+37
      %v1631 = vand.u32 %v1026, 2147483648
      %v1632 = vor.u32 1.1754944e-38, %v1631
      %v1633 = vsel %vm1630, %v1632, %v1628
      %v1634 = vmul.f32 1.0, %v1633
      %v1635 = vrcp.pop %v1027
      %v1636 = vmul.f32 %v1027, %v1635
      %v1637 = vsub.f32 1.0, %v1636
      %v1638 = vmul.f32 %v1635, %v1637
      %v1639 = vadd.f32 %v1635, %v1638
      %vm1640 = vweird.f32 %v1027
      %vm1641 = vweird.f32 %v1635
      %vm1642 = vmor %vm1640, %vm1641
      %v1643 = vsel %vm1642, %v1635, %v1639
      %v1644 = vand.u32 2147483647, %v1027
      %vm1645 = vcmp.eq.f32.partialorder %v1644, 8.507059e+37
      %v1646 = vand.u32 %v1027, 2147483648
      %v1647 = vor.u32 1.1754944e-38, %v1646
      %v1648 = vsel %vm1645, %v1647, %v1643
      %v1649 = vmul.f32 1.0, %v1648
      %v1650 = vrcp.pop %v1028
      %v1651 = vmul.f32 %v1028, %v1650
      %v1652 = vsub.f32 1.0, %v1651
      %v1653 = vmul.f32 %v1650, %v1652
      %v1654 = vadd.f32 %v1650, %v1653
      %vm1655 = vweird.f32 %v1028
      %vm1656 = vweird.f32 %v1650
      %vm1657 = vmor %vm1655, %vm1656
      %v1658 = vsel %vm1657, %v1650, %v1654
      %v1659 = vand.u32 2147483647, %v1028
      %vm1660 = vcmp.eq.f32.partialorder %v1659, 8.507059e+37
      %v1661 = vand.u32 %v1028, 2147483648
      %v1662 = vor.u32 1.1754944e-38, %v1661
      %v1663 = vsel %vm1660, %v1662, %v1658
      %v1664 = vmul.f32 1.0, %v1663
      %v1665 = vrcp.pop %v1029
      %v1666 = vmul.f32 %v1029, %v1665
      %v1667 = vsub.f32 1.0, %v1666
      %v1668 = vmul.f32 %v1665, %v1667
      %v1669 = vadd.f32 %v1665, %v1668
      %vm1670 = vweird.f32 %v1029
      %vm1671 = vweird.f32 %v1665
      %vm1672 = vmor %vm1670, %vm1671
      %v1673 = vsel %vm1672, %v1665, %v1669
      %v1674 = vand.u32 2147483647, %v1029
      %vm1675 = vcmp.eq.f32.partialorder %v1674, 8.507059e+37
      %v1676 = vand.u32 %v1029, 2147483648
      %v1677 = vor.u32 1.1754944e-38, %v1676
      %v1678 = vsel %vm1675, %v1677, %v1673
      %v1679 = vmul.f32 1.0, %v1678
      %v1680 = vrcp.pop %v1030
      %v1681 = vmul.f32 %v1030, %v1680
      %v1682 = vsub.f32 1.0, %v1681
      %v1683 = vmul.f32 %v1680, %v1682
      %v1684 = vadd.f32 %v1680, %v1683
      %vm1685 = vweird.f32 %v1030
      %vm1686 = vweird.f32 %v1680
      %vm1687 = vmor %vm1685, %vm1686
      %v1688 = vsel %vm1687, %v1680, %v1684
      %v1689 = vand.u32 2147483647, %v1030
      %vm1690 = vcmp.eq.f32.partialorder %v1689, 8.507059e+37
      %v1691 = vand.u32 %v1030, 2147483648
      %v1692 = vor.u32 1.1754944e-38, %v1691
      %v1693 = vsel %vm1690, %v1692, %v1688
      %v1694 = vmul.f32 1.0, %v1693
      %v1695 = vrcp.pop %v1031
      %v1696 = vmul.f32 %v1031, %v1695
      %v1697 = vsub.f32 1.0, %v1696
      %v1698 = vmul.f32 %v1695, %v1697
      %v1699 = vadd.f32 %v1695, %v1698
      %vm1700 = vweird.f32 %v1031
      %vm1701 = vweird.f32 %v1695
      %vm1702 = vmor %vm1700, %vm1701
      %v1703 = vsel %vm1702, %v1695, %v1699
      %v1704 = vand.u32 2147483647, %v1031
      %vm1705 = vcmp.eq.f32.partialorder %v1704, 8.507059e+37
      %v1706 = vand.u32 %v1031, 2147483648
      %v1707 = vor.u32 1.1754944e-38, %v1706
      %v1708 = vsel %vm1705, %v1707, %v1703
      %v1709 = vmul.f32 1.0, %v1708
      %v1710 = vrcp.pop %v1032
      %v1711 = vmul.f32 %v1032, %v1710
      %v1712 = vsub.f32 1.0, %v1711
      %v1713 = vmul.f32 %v1710, %v1712
      %v1714 = vadd.f32 %v1710, %v1713
      %vm1715 = vweird.f32 %v1032
      %vm1716 = vweird.f32 %v1710
      %vm1717 = vmor %vm1715, %vm1716
      %v1718 = vsel %vm1717, %v1710, %v1714
      %v1719 = vand.u32 2147483647, %v1032
      %vm1720 = vcmp.eq.f32.partialorder %v1719, 8.507059e+37
      %v1721 = vand.u32 %v1032, 2147483648
      %v1722 = vor.u32 1.1754944e-38, %v1721
      %v1723 = vsel %vm1720, %v1722, %v1718
      %v1724 = vmul.f32 1.0, %v1723
      %v1725 = vrcp.pop %v1033
      %v1726 = vmul.f32 %v1033, %v1725
      %v1727 = vsub.f32 1.0, %v1726
      %v1728 = vmul.f32 %v1725, %v1727
      %v1729 = vadd.f32 %v1725, %v1728
      %vm1730 = vweird.f32 %v1033
      %vm1731 = vweird.f32 %v1725
      %vm1732 = vmor %vm1730, %vm1731
      %v1733 = vsel %vm1732, %v1725, %v1729
      %v1734 = vand.u32 2147483647, %v1033
      %vm1735 = vcmp.eq.f32.partialorder %v1734, 8.507059e+37
      %v1736 = vand.u32 %v1033, 2147483648
      %v1737 = vor.u32 1.1754944e-38, %v1736
      %v1738 = vsel %vm1735, %v1737, %v1733
      %v1739 = vmul.f32 1.0, %v1738
      %v1740 = vrcp.pop %v1034
      %v1741 = vmul.f32 %v1034, %v1740
      %v1742 = vsub.f32 1.0, %v1741
      %v1743 = vmul.f32 %v1740, %v1742
      %v1744 = vadd.f32 %v1740, %v1743
      %vm1745 = vweird.f32 %v1034
      %vm1746 = vweird.f32 %v1740
      %vm1747 = vmor %vm1745, %vm1746
      %v1748 = vsel %vm1747, %v1740, %v1744
      %v1749 = vand.u32 2147483647, %v1034
      %vm1750 = vcmp.eq.f32.partialorder %v1749, 8.507059e+37
      %v1751 = vand.u32 %v1034, 2147483648
      %v1752 = vor.u32 1.1754944e-38, %v1751
      %v1753 = vsel %vm1750, %v1752, %v1748
      %v1754 = vmul.f32 1.0, %v1753
      %v1755 = vmul.f32 %v1049, 255.0
      %v1756 = vmul.f32 %v1064, 255.0
      %v1757 = vmul.f32 %v1079, 255.0
      %v1758 = vmul.f32 %v1094, 255.0
      %v1759 = vmul.f32 %v1109, 255.0
      %v1760 = vmul.f32 %v1124, 255.0
      %v1761 = vmul.f32 %v1139, 255.0
      %v1762 = vmul.f32 %v1154, 255.0
      %v1763 = vmul.f32 %v1169, 255.0
      %v1764 = vmul.f32 %v1184, 255.0
      %v1765 = vmul.f32 %v1199, 255.0
      %v1766 = vmul.f32 %v1214, 255.0
      %v1767 = vmul.f32 %v1229, 255.0
      %v1768 = vmul.f32 %v1244, 255.0
      %v1769 = vmul.f32 %v1259, 255.0
      %v1770 = vmul.f32 %v1274, 255.0
      %v1771 = vmul.f32 %v1289, 255.0
      %v1772 = vmul.f32 %v1304, 255.0
      %v1773 = vmul.f32 %v1319, 255.0
      %v1774 = vmul.f32 %v1334, 255.0
      %v1775 = vmul.f32 %v1349, 255.0
      %v1776 = vmul.f32 %v1364, 255.0
      %v1777 = vmul.f32 %v1379, 255.0
      %v1778 = vmul.f32 %v1394, 255.0
      %v1779 = vmul.f32 %v1409, 255.0
      %v1780 = vmul.f32 %v1424, 255.0
      %v1781 = vmul.f32 %v1439, 255.0
      %v1782 = vmul.f32 %v1454, 255.0
      %v1783 = vmul.f32 %v1469, 255.0
      %v1784 = vmul.f32 %v1484, 255.0
      %v1785 = vmul.f32 %v1499, 255.0
      %v1786 = vmul.f32 %v1514, 255.0
      %v1787 = vmul.f32 %v1529, 255.0
      %v1788 = vmul.f32 %v1544, 255.0
      %v1789 = vmul.f32 %v1559, 255.0
      %v1790 = vmul.f32 %v1574, 255.0
      %v1791 = vmul.f32 %v1589, 255.0
      %v1792 = vmul.f32 %v1604, 255.0
      %v1793 = vmul.f32 %v1619, 255.0
      %v1794 = vmul.f32 %v1634, 255.0
      %v1795 = vmul.f32 %v1649, 255.0
      %v1796 = vmul.f32 %v1664, 255.0
      %v1797 = vmul.f32 %v1679, 255.0
      %v1798 = vmul.f32 %v1694, 255.0
      %v1799 = vmul.f32 %v1709, 255.0
      %v1800 = vmul.f32 %v1724, 255.0
      %v1801 = vmul.f32 %v1739, 255.0
      %v1802 = vmul.f32 %v1754, 255.0
      %1803 = vst [vmem:[%s282] sm:$0xff] %v1755
      %1804 = vst [vmem:[%s282 + $0x8] sm:$0xff] %v1756
      %1805 = vst.msk [vmem:[%s282 + $0x10] sm:$0xff] %vm450, %v1757
      %1806 = vst [vmem:[%s282 + $0x18] sm:$0xff] %v1758
      %1807 = vst [vmem:[%s282 + $0x20] sm:$0xff] %v1759
      %1808 = vst.msk [vmem:[%s282 + $0x28] sm:$0xff] %vm450, %v1760
      %1809 = vst [vmem:[%s282 + $0x30] sm:$0xff] %v1761
      %1810 = vst [vmem:[%s282 + $0x38] sm:$0xff] %v1762
      %1811 = vst.msk [vmem:[%s282 + $0x40] sm:$0xff] %vm450, %v1763
      %1812 = vst [vmem:[%s282 + $0x48] sm:$0xff] %v1764
      %1813 = vst [vmem:[%s282 + $0x50] sm:$0xff] %v1765
      %1814 = vst.msk [vmem:[%s282 + $0x58] sm:$0xff] %vm450, %v1766
      %1815 = vst [vmem:[%s282 + $0x60] sm:$0xff] %v1767
      %1816 = vst [vmem:[%s282 + $0x68] sm:$0xff] %v1768
      %1817 = vst.msk [vmem:[%s282 + $0x70] sm:$0xff] %vm450, %v1769
      %1818 = vst [vmem:[%s282 + $0x78] sm:$0xff] %v1770
      %1819 = vst [vmem:[%s282 + $0x80] sm:$0xff] %v1771
      %1820 = vst.msk [vmem:[%s282 + $0x88] sm:$0xff] %vm450, %v1772
      %1821 = vst [vmem:[%s282 + $0x90] sm:$0xff] %v1773
      %1822 = vst [vmem:[%s282 + $0x98] sm:$0xff] %v1774
      %1823 = vst.msk [vmem:[%s282 + $0xa0] sm:$0xff] %vm450, %v1775
      %1824 = vst [vmem:[%s282 + $0xa8] sm:$0xff] %v1776
      %1825 = vst [vmem:[%s282 + $0xb0] sm:$0xff] %v1777
      %1826 = vst.msk [vmem:[%s282 + $0xb8] sm:$0xff] %vm450, %v1778
      %1827 = vst [vmem:[%s282 + $0xc0] sm:$0xff] %v1779
      %1828 = vst [vmem:[%s282 + $0xc8] sm:$0xff] %v1780
      %1829 = vst.msk [vmem:[%s282 + $0xd0] sm:$0xff] %vm450, %v1781
      %1830 = vst [vmem:[%s282 + $0xd8] sm:$0xff] %v1782
      %1831 = vst [vmem:[%s282 + $0xe0] sm:$0xff] %v1783
      %1832 = vst.msk [vmem:[%s282 + $0xe8] sm:$0xff] %vm450, %v1784
      %1833 = vst [vmem:[%s282 + $0xf0] sm:$0xff] %v1785
      %1834 = vst [vmem:[%s282 + $0xf8] sm:$0xff] %v1786
      %1835 = vst.msk [vmem:[%s282 + $0x100] sm:$0xff] %vm450, %v1787
      %1836 = vst [vmem:[%s282 + $0x108] sm:$0xff] %v1788
      %1837 = vst [vmem:[%s282 + $0x110] sm:$0xff] %v1789
      %1838 = vst.msk [vmem:[%s282 + $0x118] sm:$0xff] %vm450, %v1790
      %1839 = vst [vmem:[%s282 + $0x120] sm:$0xff] %v1791
      %1840 = vst [vmem:[%s282 + $0x128] sm:$0xff] %v1792
      %1841 = vst.msk [vmem:[%s282 + $0x130] sm:$0xff] %vm450, %v1793
      %1842 = vst [vmem:[%s282 + $0x138] sm:$0xff] %v1794
      %1843 = vst [vmem:[%s282 + $0x140] sm:$0xff] %v1795
      %1844 = vst.msk [vmem:[%s282 + $0x148] sm:$0xff] %vm450, %v1796
      %1845 = vst [vmem:[%s282 + $0x150] sm:$0xff] %v1797
      %1846 = vst [vmem:[%s282 + $0x158] sm:$0xff] %v1798
      %1847 = vst.msk [vmem:[%s282 + $0x160] sm:$0xff] %vm450, %v1799
      %1848 = vst [vmem:[%s282 + $0x168] sm:$0xff] %v1800
      %1849 = vst [vmem:[%s282 + $0x170] sm:$0xff] %v1801
      %1850 = vst.msk [vmem:[%s282 + $0x178] sm:$0xff] %vm450, %v1802
      %s1851 = smul.u32 16, %s18
      %p1852 = scmp.lt.s32.totalorder %s1851, 31
      %s1853 = scalar_select %p1852, %s1851, 31
      %s1854 = smul.addr %s1853, 3
      %s1855 = smul.addr %s1854, 8
      %s1856 = scalar_lea.vmem %s7, %s1855
      // Predicated region
      $region49: #{photo_mlp_forward.1} parent=47 // pred_check
        %p1857 = pneg %p188
      $region50: #{photo_mlp_forward.1} parent=47 // pred_check_branch
        %1859 = sbr.rel (%p1857) target = $region52
      $region51: #{photo_mlp_forward.1} parent=47 // pred_region
        %s1860 = smul.u32 16, %s18
      $region52: #{photo_mlp_forward.1} parent=47 // pred_fallthru
        _
    $region48: #{photo_mlp_forward.1} parent=5 // pred_fallthru
      _
    %p1861 = scmp.le.s32.totalorder 2, %s13
    // Predicated region
    $region53: #{photo_mlp_forward.1} parent=5 // pred_check
      %p1862 = pneg %p1861
    $region54: #{photo_mlp_forward.1} parent=5 // pred_check_branch
      %1864 = sbr.rel (%p1862) target = $region56
    $region55: #{photo_mlp_forward.1} parent=5 // pred_region
      %s1865 = ssub.s32 %s13, 2
      // Predicated region
      $region57: #{photo_mlp_forward.1} parent=55 // pred_check
        %p1866 = pneg %p194
      $region58: #{photo_mlp_forward.1} parent=55 // pred_check_branch
        %1868 = sbr.rel (%p1866) target = $region60
      $region59: #{photo_mlp_forward.1} parent=55 // pred_region
        %s1869 = smul.u32 16, %s19
        %p1870 = scmp.lt.s32.totalorder %s1869, 31
        %s1871 = scalar_select %p1870, %s1869, 31
        %s1872 = smul.addr %s1871, 3
        %s1873 = smul.addr %s1872, 8
        %s1874 = scalar_lea.vmem %s7, %s1873
      $region60: #{photo_mlp_forward.1} parent=55 // pred_fallthru
        _
    $region56: #{photo_mlp_forward.1} parent=5 // pred_fallthru
      _
  $region6: #{photo_mlp_forward.1} parent=0 // loop_footer
    %s17 = sadd.s32 1, %s13
  $region7: #{photo_mlp_forward.1} parent=0 // loop_footer_branch
    %12 = sbr.rel target = $region3
  $region8: #{photo_mlp_forward.1} parent=0 // loop_exit
    _

</llo_original>
